<compile_context>
chip_gen: v6e
topology: v6e:2x2x1
jax: 0.10.0
libtpu: 0.0.40
codegen_flags: <defaults>
</compile_context>

<pallas_src>
import functools
import math

import numpy as np
import jax
import jax.numpy as jnp
from jax import lax
from jax.experimental import pallas as pl
from jax.experimental.pallas import tpu as pltpu


# ----------------------------------------------------------------------------
# Pallas kernel: single invocation, full cross-attention for the whole batch.
# ----------------------------------------------------------------------------
def cross_attention_kernel(x_ref, p_ref, o_ref, *, B, N, num_heads, head_dim, dim,
                           out_dim, off_q, off_wkv, off_wo, off_bkv, off_bo):
    f32 = jnp.float32
    scale = 1.0 / math.sqrt(head_dim)
    Qn = o_ref.shape[1]

    x = x_ref[...]                                     # (B*N, Cctx)
    Cctx = x.shape[1]

    # Static, 8-aligned sublane views into the single packed parameter buffer.
    q_all = p_ref[off_q:off_q + Qn, :]                 # (Qn, 128)  lanes >= dim are zero pad
    wkv   = p_ref[off_wkv:off_wkv + Cctx, :]           # (Cctx, 2*dim)
    wo    = p_ref[off_wo:off_wo + dim, :]              # (dim, out_dim)
    b_kv  = p_ref[off_bkv:off_bkv + 1, :]              # (1, 2*dim)
    b_o   = p_ref[off_bo:off_bo + 1, :]                # (1, out_dim)

    # Fused, lane-dense kv projection for BOTH batch elements at once:
    # (B*N, Cctx) @ (Cctx, 2*dim) -> (B*N, 2*dim); lanes [0,dim)=k, [dim,2*dim)=v.
    kv = jnp.dot(x, wkv, preferred_element_type=f32) + b_kv

    hd = head_dim
    batch_outs = []
    for b in range(B):                                 # static unroll, B=2
        kv_b = kv[b * N:(b + 1) * N, :]                # (N, 2*dim), 8-aligned sublane slice
        head_outs = []
        for h in range(num_heads):                     # static unroll, H=4
            qh = q_all[:, h * hd:(h + 1) * hd]         # (Qn, hd)   lane slice (XLU, idle slot)
            kh = kv_b[:, h * hd:(h + 1) * hd]          # (N, hd)
            vh = kv_b[:, dim + h * hd:dim + (h + 1) * hd]  # (N, hd)

            # scores: contract last dims -> (Qn, N); no materialized K transpose.
            s = lax.dot_general(qh, kh, (((1,), (1,)), ((), ())),
                                preferred_element_type=f32) * scale
            s = s - jnp.max(s, axis=-1, keepdims=True)
            e = jnp.exp(s)
            p = e * pl.reciprocal(jnp.sum(e, axis=-1, keepdims=True), approx=True)
            head_outs.append(jnp.dot(p, vh, preferred_element_type=f32))  # (Qn, hd)
        batch_outs.append(jnp.concatenate(head_outs, axis=-1))            # (Qn, dim)

    # One fused o_proj for the whole batch: (B*Qn, dim) @ (dim, out_dim).
    o_cat = jnp.concatenate(batch_outs, axis=0)        # (B*Qn, dim)
    out_all = jnp.dot(o_cat, wo, preferred_element_type=f32) + b_o        # (B*Qn, out_dim)

    for b in range(B):
        o_ref[b] = out_all[b * Qn:(b + 1) * Qn, :out_dim]


# ----------------------------------------------------------------------------
# pallas_call wrapper
# ----------------------------------------------------------------------------
def cross_attention_pallas(x, pack, meta):
    B, N, Cctx = x.shape
    Qn, out_dim = meta["Qn"], meta["out_dim"]
    x_flat = x.reshape(B * N, Cctx)                    # contiguous -> free bitcast reshape

    kernel = functools.partial(
        cross_attention_kernel,
        B=B, N=N, num_heads=meta["num_heads"], head_dim=meta["head_dim"],
        dim=meta["dim"], out_dim=out_dim,
        off_q=meta["offsets"]["q"], off_wkv=meta["offsets"]["wkv"],
        off_wo=meta["offsets"]["wo"], off_bkv=meta["offsets"]["bkv"],
        off_bo=meta["offsets"]["bo"])

    return pl.pallas_call(
        kernel,
        out_shape=jax.ShapeDtypeStruct((B, Qn, out_dim), jnp.float32),
        grid=(1,),
        in_specs=[pl.BlockSpec((B * N, Cctx), lambda i: (0, 0)),
                  pl.BlockSpec(pack.shape, lambda i: (0, 0))],
        out_specs=pl.BlockSpec((B, Qn, out_dim), lambda i: (0, 0, 0)),
        compiler_params=pltpu.CompilerParams(dimension_semantics=("arbitrary",)),
    )(x_flat, pack)


# ----------------------------------------------------------------------------
# parameter construction (PyTorch nn.Linear layout) + packing for the kernel
# ----------------------------------------------------------------------------
def init_raw_params(key, context_dim, dim, out_dim, num_heads, num_queries):
    ks = jax.random.split(key, 7)

    def lin(kw, kb, out_f, in_f):
        bound = 1.0 / math.sqrt(in_f)
        w = jax.random.uniform(kw, (out_f, in_f), jnp.float32, -bound, bound)
        b = jax.random.uniform(kb, (out_f,), jnp.float32, -bound, bound)
        return w, b

    query = 0.02 * jax.random.normal(ks[0], (num_queries, dim), dtype=jnp.float32)
    wq, bq = lin(ks[1], ks[2], dim, dim)                 # q_proj:  (dim, dim)
    wkv, bkv = lin(ks[3], ks[4], 2 * dim, context_dim)   # kv_proj: (2*dim, context_dim)
    wo, bo = lin(ks[5], ks[6], out_dim, dim)             # o_proj:  (out_dim, dim)
    return dict(query=query, wq=wq, bq=bq, wkv=wkv, bkv=bkv, wo=wo, bo=bo)


def prepare_kernel_params(raw, num_heads):
    """Fold + pack parameters: pre-transpose weights, constant-fold the batch-invariant
    q projection, and concatenate everything into ONE lane-dense (rows, 128) buffer."""
    query = raw["query"]
    Qn, dim = query.shape
    Cctx = raw["wkv"].shape[1]
    out_dim = raw["wo"].shape[0]

    # q_proj(query) does not depend on the input x -> constant-fold it here (done once).
    q_pre = query @ raw["wq"].T + raw["bq"]              # (Qn, dim)
    wkv_t = raw["wkv"].T                                  # (Cctx, 2*dim)
    wo_t = raw["wo"].T                                    # (dim, out_dim)
    b_kv = raw["bkv"].reshape(1, 2 * dim)
    b_o = raw["bo"].reshape(1, out_dim)

    lane_w = max(dim, 2 * dim, out_dim)
    lane_w = ((lane_w + 127) // 128) * 128                # lane-dense pack width

    pieces, offsets, row = [], {}, 0
    for name, arr in (("q", q_pre), ("wkv", wkv_t), ("wo", wo_t),
                      ("bkv", b_kv), ("bo", b_o)):
        r, c = arr.shape
        r_pad = ((r + 7) // 8) * 8                        # 8-aligned sublane groups
        blk = jnp.zeros((r_pad, lane_w), jnp.float32).at[:r, :c].set(arr)
        pieces.append(blk)
        offsets[name] = row
        row += r_pad
    pack = jnp.concatenate(pieces, axis=0)                # (rows, lane_w) single param DMA

    meta = dict(offsets=offsets, Qn=Qn, dim=dim, Cctx=Cctx, out_dim=out_dim,
                num_heads=num_heads, head_dim=dim // num_heads)
    return pack, meta


# ----------------------------------------------------------------------------
# pure-JAX reference mirroring the PyTorch forward (for validation)
# ----------------------------------------------------------------------------
def ref_cross_attention(x, raw, num_heads):
    B, N, _ = x.shape
    query = raw["query"]
    Qn, dim = query.shape
    hd = dim // num_heads

    q = query @ raw["wq"].T + raw["bq"]                   # (Q, dim)
    q = jnp.broadcast_to(q, (B, Qn, dim))
    q = q.reshape(B, Qn, num_heads, hd).transpose(0, 2, 1, 3)      # (B, H, Q, hd)

    kv = x @ raw["wkv"].T + raw["bkv"]                    # (B, N, 2*dim)
    kv = kv.reshape(B, N, 2, num_heads, hd).transpose(2, 0, 3, 1, 4)
    k, v = kv[0], kv[1]                                   # (B, H, N, hd)

    s = jnp.einsum('bhqd,bhnd->bhqn', q, k) / math.sqrt(hd)
    a = jax.nn.softmax(s, axis=-1)
    o = jnp.einsum('bhqn,bhnd->bhqd', a, v)
    o = o.transpose(0, 2, 1, 3).reshape(B, Qn, dim)
    return o @ raw["wo"].T + raw["bo"]


# ----------------------------------------------------------------------------
# main
# ----------------------------------------------------------------------------
if __name__ == "__main__":
    B, N = 2, 16                      # batch, context tokens
    context_dim, dim, out_dim = 32, 64, 128
    num_heads, num_queries = 4, 8

    key = jax.random.PRNGKey(0)
    kx, kparam = jax.random.split(key)

    x = jax.random.normal(kx, (B, N, context_dim), dtype=jnp.float32)

    raw = init_raw_params(kparam, context_dim, dim, out_dim, num_heads, num_queries)
    pack, meta = prepare_kernel_params(raw, num_heads)

    out = cross_attention_pallas(x, pack, meta)
    out = jax.block_until_ready(out)

    ref = ref_cross_attention(x, raw, num_heads)
    ref = jax.block_until_ready(ref)

    np.testing.assert_allclose(np.asarray(out), np.asarray(ref), rtol=5e-3, atol=5e-3)
    assert out.shape == (B, num_queries, out_dim)
    print("KERNEL_OK")
</pallas_src>

<mosaic_0001>
module attributes {stable_mosaic.version = 11 : i64} {
  func.func @cross_attention_kernel(%arg0: i32, %arg1: memref<32x32xf32, #tpu.memory_space<vmem>>, %arg2: memref<120x128xf32, #tpu.memory_space<vmem>>, %arg3: memref<2x8x128xf32, #tpu.memory_space<vmem>>) attributes {dimension_semantics = [#tpu.dimension_semantics<arbitrary>], iteration_bounds = array<i64: 1>, scalar_prefetch = 0 : i64, scratch_operands = 0 : i64, tpu.core_type = #tpu.core_type<tc>, window_params = [{pipeline_mode = #tpu.pipeline_mode<synchronous>, transform_indices = @transform_0, window_bounds = array<i64: 32, 32>}, {pipeline_mode = #tpu.pipeline_mode<synchronous>, transform_indices = @transform_1, window_bounds = array<i64: 120, 128>}, {pipeline_mode = #tpu.pipeline_mode<synchronous>, transform_indices = @transform_2, window_bounds = array<i64: 2, 8, 128>}]} {
    %c0 = arith.constant 0 : index
    %c0_0 = arith.constant 0 : index
    %0 = vector.load %arg1[%c0, %c0_0] : memref<32x32xf32, #tpu.memory_space<vmem>>, vector<32x32xf32>
    %c0_1 = arith.constant 0 : index
    %c0_2 = arith.constant 0 : index
    %1 = vector.load %arg2[%c0_1, %c0_2] : memref<120x128xf32, #tpu.memory_space<vmem>>, vector<8x128xf32>
    %c8 = arith.constant 8 : index
    %c0_3 = arith.constant 0 : index
    %2 = vector.load %arg2[%c8, %c0_3] : memref<120x128xf32, #tpu.memory_space<vmem>>, vector<32x128xf32>
    %c40 = arith.constant 40 : index
    %c0_4 = arith.constant 0 : index
    %3 = vector.load %arg2[%c40, %c0_4] : memref<120x128xf32, #tpu.memory_space<vmem>>, vector<64x128xf32>
    %c104 = arith.constant 104 : index
    %c0_5 = arith.constant 0 : index
    %4 = vector.load %arg2[%c104, %c0_5] : memref<120x128xf32, #tpu.memory_space<vmem>>, vector<1x128xf32>
    %c112 = arith.constant 112 : index
    %c0_6 = arith.constant 0 : index
    %5 = vector.load %arg2[%c112, %c0_6] : memref<120x128xf32, #tpu.memory_space<vmem>>, vector<1x128xf32>
    %cst = arith.constant dense<0.000000e+00> : vector<32x128xf32>
    %6 = tpu.matmul %0, %2, %cst {dimension_numbers = #tpu.dot_dimension_numbers<[1], [0], [0], [1], [0, 0, 1, 1], [], []>} : vector<32x32xf32>, vector<32x128xf32>, vector<32x128xf32> -> vector<32x128xf32>
    %7 = vector.broadcast %4 : vector<1x128xf32> to vector<32x128xf32>
    %8 = arith.addf %6, %7 : vector<32x128xf32>
    %9 = vector.extract_strided_slice %8 {offsets = [0, 0], sizes = [16, 128], strides = [1, 1]} : vector<32x128xf32> to vector<16x128xf32>
    %10 = vector.extract_strided_slice %1 {offsets = [0, 0], sizes = [8, 16], strides = [1, 1]} : vector<8x128xf32> to vector<8x16xf32>
    %11 = vector.extract_strided_slice %9 {offsets = [0, 0], sizes = [16, 16], strides = [1, 1]} : vector<16x128xf32> to vector<16x16xf32>
    %12 = vector.extract_strided_slice %9 {offsets = [0, 64], sizes = [16, 16], strides = [1, 1]} : vector<16x128xf32> to vector<16x16xf32>
    %cst_7 = arith.constant dense<0.000000e+00> : vector<8x16xf32>
    %13 = tpu.matmul %10, %11, %cst_7 {dimension_numbers = #tpu.dot_dimension_numbers<[1], [1], [0], [0], [0, 0, 1, 0], [], []>} : vector<8x16xf32>, vector<16x16xf32>, vector<8x16xf32> -> vector<8x16xf32>
    %cst_8 = arith.constant 2.500000e-01 : f32
    %14 = vector.broadcast %cst_8 : f32 to vector<8x16xf32>
    %15 = arith.mulf %13, %14 : vector<8x16xf32>
    %cst_9 = arith.constant dense<0xFF800000> : vector<8xf32>
    %16 = vector.multi_reduction <maximumf>, %15, %cst_9 [1] : vector<8x16xf32> to vector<8xf32>
    %17 = vector.shape_cast %16 : vector<8xf32> to vector<8x1xf32>
    %18 = vector.broadcast %17 : vector<8x1xf32> to vector<8x16xf32>
    %19 = arith.subf %15, %18 : vector<8x16xf32>
    %20 = math.exp %19 : vector<8x16xf32>
    %cst_10 = arith.constant dense<0.000000e+00> : vector<8xf32>
    %21 = vector.multi_reduction <add>, %20, %cst_10 [1] : vector<8x16xf32> to vector<8xf32>
    %22 = vector.shape_cast %21 : vector<8xf32> to vector<8x1xf32>
    %23 = tpu.reciprocal %22 {approx = true} : vector<8x1xf32> -> vector<8x1xf32>
    %24 = vector.broadcast %23 : vector<8x1xf32> to vector<8x16xf32>
    %25 = arith.mulf %20, %24 : vector<8x16xf32>
    %cst_11 = arith.constant dense<0.000000e+00> : vector<8x16xf32>
    %26 = tpu.matmul %25, %12, %cst_11 {dimension_numbers = #tpu.dot_dimension_numbers<[1], [0], [0], [1], [0, 0, 1, 1], [], []>} : vector<8x16xf32>, vector<16x16xf32>, vector<8x16xf32> -> vector<8x16xf32>
    %27 = vector.extract_strided_slice %1 {offsets = [0, 16], sizes = [8, 16], strides = [1, 1]} : vector<8x128xf32> to vector<8x16xf32>
    %28 = vector.extract_strided_slice %9 {offsets = [0, 16], sizes = [16, 16], strides = [1, 1]} : vector<16x128xf32> to vector<16x16xf32>
    %29 = vector.extract_strided_slice %9 {offsets = [0, 80], sizes = [16, 16], strides = [1, 1]} : vector<16x128xf32> to vector<16x16xf32>
    %cst_12 = arith.constant dense<0.000000e+00> : vector<8x16xf32>
    %30 = tpu.matmul %27, %28, %cst_12 {dimension_numbers = #tpu.dot_dimension_numbers<[1], [1], [0], [0], [0, 0, 1, 0], [], []>} : vector<8x16xf32>, vector<16x16xf32>, vector<8x16xf32> -> vector<8x16xf32>
    %cst_13 = arith.constant 2.500000e-01 : f32
    %31 = vector.broadcast %cst_13 : f32 to vector<8x16xf32>
    %32 = arith.mulf %30, %31 : vector<8x16xf32>
    %cst_14 = arith.constant dense<0xFF800000> : vector<8xf32>
    %33 = vector.multi_reduction <maximumf>, %32, %cst_14 [1] : vector<8x16xf32> to vector<8xf32>
    %34 = vector.shape_cast %33 : vector<8xf32> to vector<8x1xf32>
    %35 = vector.broadcast %34 : vector<8x1xf32> to vector<8x16xf32>
    %36 = arith.subf %32, %35 : vector<8x16xf32>
    %37 = math.exp %36 : vector<8x16xf32>
    %cst_15 = arith.constant dense<0.000000e+00> : vector<8xf32>
    %38 = vector.multi_reduction <add>, %37, %cst_15 [1] : vector<8x16xf32> to vector<8xf32>
    %39 = vector.shape_cast %38 : vector<8xf32> to vector<8x1xf32>
    %40 = tpu.reciprocal %39 {approx = true} : vector<8x1xf32> -> vector<8x1xf32>
    %41 = vector.broadcast %40 : vector<8x1xf32> to vector<8x16xf32>
    %42 = arith.mulf %37, %41 : vector<8x16xf32>
    %cst_16 = arith.constant dense<0.000000e+00> : vector<8x16xf32>
    %43 = tpu.matmul %42, %29, %cst_16 {dimension_numbers = #tpu.dot_dimension_numbers<[1], [0], [0], [1], [0, 0, 1, 1], [], []>} : vector<8x16xf32>, vector<16x16xf32>, vector<8x16xf32> -> vector<8x16xf32>
    %44 = vector.extract_strided_slice %1 {offsets = [0, 32], sizes = [8, 16], strides = [1, 1]} : vector<8x128xf32> to vector<8x16xf32>
    %45 = vector.extract_strided_slice %9 {offsets = [0, 32], sizes = [16, 16], strides = [1, 1]} : vector<16x128xf32> to vector<16x16xf32>
    %46 = vector.extract_strided_slice %9 {offsets = [0, 96], sizes = [16, 16], strides = [1, 1]} : vector<16x128xf32> to vector<16x16xf32>
    %cst_17 = arith.constant dense<0.000000e+00> : vector<8x16xf32>
    %47 = tpu.matmul %44, %45, %cst_17 {dimension_numbers = #tpu.dot_dimension_numbers<[1], [1], [0], [0], [0, 0, 1, 0], [], []>} : vector<8x16xf32>, vector<16x16xf32>, vector<8x16xf32> -> vector<8x16xf32>
    %cst_18 = arith.constant 2.500000e-01 : f32
    %48 = vector.broadcast %cst_18 : f32 to vector<8x16xf32>
    %49 = arith.mulf %47, %48 : vector<8x16xf32>
    %cst_19 = arith.constant dense<0xFF800000> : vector<8xf32>
    %50 = vector.multi_reduction <maximumf>, %49, %cst_19 [1] : vector<8x16xf32> to vector<8xf32>
    %51 = vector.shape_cast %50 : vector<8xf32> to vector<8x1xf32>
    %52 = vector.broadcast %51 : vector<8x1xf32> to vector<8x16xf32>
    %53 = arith.subf %49, %52 : vector<8x16xf32>
    %54 = math.exp %53 : vector<8x16xf32>
    %cst_20 = arith.constant dense<0.000000e+00> : vector<8xf32>
    %55 = vector.multi_reduction <add>, %54, %cst_20 [1] : vector<8x16xf32> to vector<8xf32>
    %56 = vector.shape_cast %55 : vector<8xf32> to vector<8x1xf32>
    %57 = tpu.reciprocal %56 {approx = true} : vector<8x1xf32> -> vector<8x1xf32>
    %58 = vector.broadcast %57 : vector<8x1xf32> to vector<8x16xf32>
    %59 = arith.mulf %54, %58 : vector<8x16xf32>
    %cst_21 = arith.constant dense<0.000000e+00> : vector<8x16xf32>
    %60 = tpu.matmul %59, %46, %cst_21 {dimension_numbers = #tpu.dot_dimension_numbers<[1], [0], [0], [1], [0, 0, 1, 1], [], []>} : vector<8x16xf32>, vector<16x16xf32>, vector<8x16xf32> -> vector<8x16xf32>
    %61 = vector.extract_strided_slice %1 {offsets = [0, 48], sizes = [8, 16], strides = [1, 1]} : vector<8x128xf32> to vector<8x16xf32>
    %62 = vector.extract_strided_slice %9 {offsets = [0, 48], sizes = [16, 16], strides = [1, 1]} : vector<16x128xf32> to vector<16x16xf32>
    %63 = vector.extract_strided_slice %9 {offsets = [0, 112], sizes = [16, 16], strides = [1, 1]} : vector<16x128xf32> to vector<16x16xf32>
    %cst_22 = arith.constant dense<0.000000e+00> : vector<8x16xf32>
    %64 = tpu.matmul %61, %62, %cst_22 {dimension_numbers = #tpu.dot_dimension_numbers<[1], [1], [0], [0], [0, 0, 1, 0], [], []>} : vector<8x16xf32>, vector<16x16xf32>, vector<8x16xf32> -> vector<8x16xf32>
    %cst_23 = arith.constant 2.500000e-01 : f32
    %65 = vector.broadcast %cst_23 : f32 to vector<8x16xf32>
    %66 = arith.mulf %64, %65 : vector<8x16xf32>
    %cst_24 = arith.constant dense<0xFF800000> : vector<8xf32>
    %67 = vector.multi_reduction <maximumf>, %66, %cst_24 [1] : vector<8x16xf32> to vector<8xf32>
    %68 = vector.shape_cast %67 : vector<8xf32> to vector<8x1xf32>
    %69 = vector.broadcast %68 : vector<8x1xf32> to vector<8x16xf32>
    %70 = arith.subf %66, %69 : vector<8x16xf32>
    %71 = math.exp %70 : vector<8x16xf32>
    %cst_25 = arith.constant dense<0.000000e+00> : vector<8xf32>
    %72 = vector.multi_reduction <add>, %71, %cst_25 [1] : vector<8x16xf32> to vector<8xf32>
    %73 = vector.shape_cast %72 : vector<8xf32> to vector<8x1xf32>
    %74 = tpu.reciprocal %73 {approx = true} : vector<8x1xf32> -> vector<8x1xf32>
    %75 = vector.broadcast %74 : vector<8x1xf32> to vector<8x16xf32>
    %76 = arith.mulf %71, %75 : vector<8x16xf32>
    %cst_26 = arith.constant dense<0.000000e+00> : vector<8x16xf32>
    %77 = tpu.matmul %76, %63, %cst_26 {dimension_numbers = #tpu.dot_dimension_numbers<[1], [0], [0], [1], [0, 0, 1, 1], [], []>} : vector<8x16xf32>, vector<16x16xf32>, vector<8x16xf32> -> vector<8x16xf32>
    %78 = tpu.concatenate %26, %43, %60, %77 in 1 : vector<8x16xf32>, vector<8x16xf32>, vector<8x16xf32>, vector<8x16xf32> -> vector<8x64xf32>
    %79 = vector.extract_strided_slice %8 {offsets = [16, 0], sizes = [16, 128], strides = [1, 1]} : vector<32x128xf32> to vector<16x128xf32>
    %80 = vector.extract_strided_slice %1 {offsets = [0, 0], sizes = [8, 16], strides = [1, 1]} : vector<8x128xf32> to vector<8x16xf32>
    %81 = vector.extract_strided_slice %79 {offsets = [0, 0], sizes = [16, 16], strides = [1, 1]} : vector<16x128xf32> to vector<16x16xf32>
    %82 = vector.extract_strided_slice %79 {offsets = [0, 64], sizes = [16, 16], strides = [1, 1]} : vector<16x128xf32> to vector<16x16xf32>
    %cst_27 = arith.constant dense<0.000000e+00> : vector<8x16xf32>
    %83 = tpu.matmul %80, %81, %cst_27 {dimension_numbers = #tpu.dot_dimension_numbers<[1], [1], [0], [0], [0, 0, 1, 0], [], []>} : vector<8x16xf32>, vector<16x16xf32>, vector<8x16xf32> -> vector<8x16xf32>
    %cst_28 = arith.constant 2.500000e-01 : f32
    %84 = vector.broadcast %cst_28 : f32 to vector<8x16xf32>
    %85 = arith.mulf %83, %84 : vector<8x16xf32>
    %cst_29 = arith.constant dense<0xFF800000> : vector<8xf32>
    %86 = vector.multi_reduction <maximumf>, %85, %cst_29 [1] : vector<8x16xf32> to vector<8xf32>
    %87 = vector.shape_cast %86 : vector<8xf32> to vector<8x1xf32>
    %88 = vector.broadcast %87 : vector<8x1xf32> to vector<8x16xf32>
    %89 = arith.subf %85, %88 : vector<8x16xf32>
    %90 = math.exp %89 : vector<8x16xf32>
    %cst_30 = arith.constant dense<0.000000e+00> : vector<8xf32>
    %91 = vector.multi_reduction <add>, %90, %cst_30 [1] : vector<8x16xf32> to vector<8xf32>
    %92 = vector.shape_cast %91 : vector<8xf32> to vector<8x1xf32>
    %93 = tpu.reciprocal %92 {approx = true} : vector<8x1xf32> -> vector<8x1xf32>
    %94 = vector.broadcast %93 : vector<8x1xf32> to vector<8x16xf32>
    %95 = arith.mulf %90, %94 : vector<8x16xf32>
    %cst_31 = arith.constant dense<0.000000e+00> : vector<8x16xf32>
    %96 = tpu.matmul %95, %82, %cst_31 {dimension_numbers = #tpu.dot_dimension_numbers<[1], [0], [0], [1], [0, 0, 1, 1], [], []>} : vector<8x16xf32>, vector<16x16xf32>, vector<8x16xf32> -> vector<8x16xf32>
    %97 = vector.extract_strided_slice %1 {offsets = [0, 16], sizes = [8, 16], strides = [1, 1]} : vector<8x128xf32> to vector<8x16xf32>
    %98 = vector.extract_strided_slice %79 {offsets = [0, 16], sizes = [16, 16], strides = [1, 1]} : vector<16x128xf32> to vector<16x16xf32>
    %99 = vector.extract_strided_slice %79 {offsets = [0, 80], sizes = [16, 16], strides = [1, 1]} : vector<16x128xf32> to vector<16x16xf32>
    %cst_32 = arith.constant dense<0.000000e+00> : vector<8x16xf32>
    %100 = tpu.matmul %97, %98, %cst_32 {dimension_numbers = #tpu.dot_dimension_numbers<[1], [1], [0], [0], [0, 0, 1, 0], [], []>} : vector<8x16xf32>, vector<16x16xf32>, vector<8x16xf32> -> vector<8x16xf32>
    %cst_33 = arith.constant 2.500000e-01 : f32
    %101 = vector.broadcast %cst_33 : f32 to vector<8x16xf32>
    %102 = arith.mulf %100, %101 : vector<8x16xf32>
    %cst_34 = arith.constant dense<0xFF800000> : vector<8xf32>
    %103 = vector.multi_reduction <maximumf>, %102, %cst_34 [1] : vector<8x16xf32> to vector<8xf32>
    %104 = vector.shape_cast %103 : vector<8xf32> to vector<8x1xf32>
    %105 = vector.broadcast %104 : vector<8x1xf32> to vector<8x16xf32>
    %106 = arith.subf %102, %105 : vector<8x16xf32>
    %107 = math.exp %106 : vector<8x16xf32>
    %cst_35 = arith.constant dense<0.000000e+00> : vector<8xf32>
    %108 = vector.multi_reduction <add>, %107, %cst_35 [1] : vector<8x16xf32> to vector<8xf32>
    %109 = vector.shape_cast %108 : vector<8xf32> to vector<8x1xf32>
    %110 = tpu.reciprocal %109 {approx = true} : vector<8x1xf32> -> vector<8x1xf32>
    %111 = vector.broadcast %110 : vector<8x1xf32> to vector<8x16xf32>
    %112 = arith.mulf %107, %111 : vector<8x16xf32>
    %cst_36 = arith.constant dense<0.000000e+00> : vector<8x16xf32>
    %113 = tpu.matmul %112, %99, %cst_36 {dimension_numbers = #tpu.dot_dimension_numbers<[1], [0], [0], [1], [0, 0, 1, 1], [], []>} : vector<8x16xf32>, vector<16x16xf32>, vector<8x16xf32> -> vector<8x16xf32>
    %114 = vector.extract_strided_slice %1 {offsets = [0, 32], sizes = [8, 16], strides = [1, 1]} : vector<8x128xf32> to vector<8x16xf32>
    %115 = vector.extract_strided_slice %79 {offsets = [0, 32], sizes = [16, 16], strides = [1, 1]} : vector<16x128xf32> to vector<16x16xf32>
    %116 = vector.extract_strided_slice %79 {offsets = [0, 96], sizes = [16, 16], strides = [1, 1]} : vector<16x128xf32> to vector<16x16xf32>
    %cst_37 = arith.constant dense<0.000000e+00> : vector<8x16xf32>
    %117 = tpu.matmul %114, %115, %cst_37 {dimension_numbers = #tpu.dot_dimension_numbers<[1], [1], [0], [0], [0, 0, 1, 0], [], []>} : vector<8x16xf32>, vector<16x16xf32>, vector<8x16xf32> -> vector<8x16xf32>
    %cst_38 = arith.constant 2.500000e-01 : f32
    %118 = vector.broadcast %cst_38 : f32 to vector<8x16xf32>
    %119 = arith.mulf %117, %118 : vector<8x16xf32>
    %cst_39 = arith.constant dense<0xFF800000> : vector<8xf32>
    %120 = vector.multi_reduction <maximumf>, %119, %cst_39 [1] : vector<8x16xf32> to vector<8xf32>
    %121 = vector.shape_cast %120 : vector<8xf32> to vector<8x1xf32>
    %122 = vector.broadcast %121 : vector<8x1xf32> to vector<8x16xf32>
    %123 = arith.subf %119, %122 : vector<8x16xf32>
    %124 = math.exp %123 : vector<8x16xf32>
    %cst_40 = arith.constant dense<0.000000e+00> : vector<8xf32>
    %125 = vector.multi_reduction <add>, %124, %cst_40 [1] : vector<8x16xf32> to vector<8xf32>
    %126 = vector.shape_cast %125 : vector<8xf32> to vector<8x1xf32>
    %127 = tpu.reciprocal %126 {approx = true} : vector<8x1xf32> -> vector<8x1xf32>
    %128 = vector.broadcast %127 : vector<8x1xf32> to vector<8x16xf32>
    %129 = arith.mulf %124, %128 : vector<8x16xf32>
    %cst_41 = arith.constant dense<0.000000e+00> : vector<8x16xf32>
    %130 = tpu.matmul %129, %116, %cst_41 {dimension_numbers = #tpu.dot_dimension_numbers<[1], [0], [0], [1], [0, 0, 1, 1], [], []>} : vector<8x16xf32>, vector<16x16xf32>, vector<8x16xf32> -> vector<8x16xf32>
    %131 = vector.extract_strided_slice %1 {offsets = [0, 48], sizes = [8, 16], strides = [1, 1]} : vector<8x128xf32> to vector<8x16xf32>
    %132 = vector.extract_strided_slice %79 {offsets = [0, 48], sizes = [16, 16], strides = [1, 1]} : vector<16x128xf32> to vector<16x16xf32>
    %133 = vector.extract_strided_slice %79 {offsets = [0, 112], sizes = [16, 16], strides = [1, 1]} : vector<16x128xf32> to vector<16x16xf32>
    %cst_42 = arith.constant dense<0.000000e+00> : vector<8x16xf32>
    %134 = tpu.matmul %131, %132, %cst_42 {dimension_numbers = #tpu.dot_dimension_numbers<[1], [1], [0], [0], [0, 0, 1, 0], [], []>} : vector<8x16xf32>, vector<16x16xf32>, vector<8x16xf32> -> vector<8x16xf32>
    %cst_43 = arith.constant 2.500000e-01 : f32
    %135 = vector.broadcast %cst_43 : f32 to vector<8x16xf32>
    %136 = arith.mulf %134, %135 : vector<8x16xf32>
    %cst_44 = arith.constant dense<0xFF800000> : vector<8xf32>
    %137 = vector.multi_reduction <maximumf>, %136, %cst_44 [1] : vector<8x16xf32> to vector<8xf32>
    %138 = vector.shape_cast %137 : vector<8xf32> to vector<8x1xf32>
    %139 = vector.broadcast %138 : vector<8x1xf32> to vector<8x16xf32>
    %140 = arith.subf %136, %139 : vector<8x16xf32>
    %141 = math.exp %140 : vector<8x16xf32>
    %cst_45 = arith.constant dense<0.000000e+00> : vector<8xf32>
    %142 = vector.multi_reduction <add>, %141, %cst_45 [1] : vector<8x16xf32> to vector<8xf32>
    %143 = vector.shape_cast %142 : vector<8xf32> to vector<8x1xf32>
    %144 = tpu.reciprocal %143 {approx = true} : vector<8x1xf32> -> vector<8x1xf32>
    %145 = vector.broadcast %144 : vector<8x1xf32> to vector<8x16xf32>
    %146 = arith.mulf %141, %145 : vector<8x16xf32>
    %cst_46 = arith.constant dense<0.000000e+00> : vector<8x16xf32>
    %147 = tpu.matmul %146, %133, %cst_46 {dimension_numbers = #tpu.dot_dimension_numbers<[1], [0], [0], [1], [0, 0, 1, 1], [], []>} : vector<8x16xf32>, vector<16x16xf32>, vector<8x16xf32> -> vector<8x16xf32>
    %148 = tpu.concatenate %96, %113, %130, %147 in 1 : vector<8x16xf32>, vector<8x16xf32>, vector<8x16xf32>, vector<8x16xf32> -> vector<8x64xf32>
    %149 = tpu.concatenate %78, %148 in 0 : vector<8x64xf32>, vector<8x64xf32> -> vector<16x64xf32>
    %cst_47 = arith.constant dense<0.000000e+00> : vector<16x128xf32>
    %150 = tpu.matmul %149, %3, %cst_47 {dimension_numbers = #tpu.dot_dimension_numbers<[1], [0], [0], [1], [0, 0, 1, 1], [], []>} : vector<16x64xf32>, vector<64x128xf32>, vector<16x128xf32> -> vector<16x128xf32>
    %151 = vector.broadcast %5 : vector<1x128xf32> to vector<16x128xf32>
    %152 = arith.addf %150, %151 : vector<16x128xf32>
    %153 = vector.extract_strided_slice %152 {offsets = [0, 0], sizes = [8, 128], strides = [1, 1]} : vector<16x128xf32> to vector<8x128xf32>
    %c0_48 = arith.constant 0 : index
    %c0_49 = arith.constant 0 : index
    %c0_50 = arith.constant 0 : index
    %154 = vector.load %arg3[%c0_48, %c0_49, %c0_50] : memref<2x8x128xf32, #tpu.memory_space<vmem>>, vector<1x8x128xf32>
    %155 = vector.shape_cast %154 : vector<1x8x128xf32> to vector<8x128xf32>
    %156 = vector.shape_cast %153 : vector<8x128xf32> to vector<1x8x128xf32>
    tpu.vector_store %arg3[%c0_48, %c0_49, %c0_50], %156 {strides = array<i32>} : memref<2x8x128xf32, #tpu.memory_space<vmem>>, vector<1x8x128xf32>,
    %157 = vector.extract_strided_slice %152 {offsets = [8, 0], sizes = [8, 128], strides = [1, 1]} : vector<16x128xf32> to vector<8x128xf32>
    %c1 = arith.constant 1 : index
    %c0_51 = arith.constant 0 : index
    %c0_52 = arith.constant 0 : index
    %158 = vector.load %arg3[%c1, %c0_51, %c0_52] : memref<2x8x128xf32, #tpu.memory_space<vmem>>, vector<1x8x128xf32>
    %159 = vector.shape_cast %158 : vector<1x8x128xf32> to vector<8x128xf32>
    %160 = vector.shape_cast %157 : vector<8x128xf32> to vector<1x8x128xf32>
    tpu.vector_store %arg3[%c1, %c0_51, %c0_52], %160 {strides = array<i32>} : memref<2x8x128xf32, #tpu.memory_space<vmem>>, vector<1x8x128xf32>,
    return
  }
  func.func @transform_0(%arg0: i32) -> (i32, i32) {
    %c0_i32 = arith.constant 0 : i32
    %c0_i32_0 = arith.constant 0 : i32
    %c0_i32_1 = arith.constant 0 : i32
    return %c0_i32, %c0_i32_0 : i32, i32
  }
  func.func @transform_1(%arg0: i32) -> (i32, i32) {
    %c0_i32 = arith.constant 0 : i32
    %c0_i32_0 = arith.constant 0 : i32
    %c0_i32_1 = arith.constant 0 : i32
    return %c0_i32, %c0_i32_0 : i32, i32
  }
  func.func @transform_2(%arg0: i32) -> (i32, i32, i32) {
    %c0_i32 = arith.constant 0 : i32
    %c0_i32_0 = arith.constant 0 : i32
    %c0_i32_1 = arith.constant 0 : i32
    %c0_i32_2 = arith.constant 0 : i32
    return %c0_i32, %c0_i32_0, %c0_i32_1 : i32, i32, i32
  }
}

</mosaic_0001>

<llo_original>
// kernel: tpu_custom_call.1
$region0: #{tpu_custom_call.1}
  #allocation0 [shape = 'u32[]', space=smem, size = 0x4, offset = 0x4, fixed_abs, tag = 'smem constant byte address 0x4 - core index']
  #allocation1 [shape = 'u32[144,128]{1,0:T(1,128)}', space=vmem, size = 0x12000, scoped, tag = 'internal scratch']
  %s0 = inlined_call_operand.hbm [shape: f32[32,32], index: 0, kind: input, shape index: {}]
  %s1 = inlined_call_operand.hbm [shape: f32[120,128], index: 1, kind: input, shape index: {}]
  %s2 = inlined_call_operand.hbm [shape: f32[2,8,128], index: 2, kind: output, shape index: {}]
  %s3 = sld [smem:[#allocation0]]
  $region26: #{tpu_custom_call.1} parent=0
    _
  %s5 = ssub.s32 1, %s3
  %s6 = scalar_select 0, %s5, %s3
  $region1: #{tpu_custom_call.1} parent=0
    #allocation2 [shape = 'u8[16384]{0}', space=vmem, size = 0x4000, scoped, tag = 'input window, operand 0, single buffered']
    #allocation3 [shape = 's32[1]{0}', space=sflag, size = 0x4, scoped, tag = 'scoped memory for tpu_custom_call.1']
    #allocation4 [shape = 's32[1]{0}', space=sflag, size = 0x4, scoped, tag = 'scoped memory for tpu_custom_call.1']
    #allocation5 [shape = 'u8[61440]{0}', space=vmem, size = 0xf000, scoped, tag = 'input window, operand 1, single buffered']
    #allocation6 [shape = 's32[1]{0}', space=sflag, size = 0x4, scoped, tag = 'scoped memory for tpu_custom_call.1']
    #allocation7 [shape = 'u8[8192]{0}', space=vmem, size = 0x2000, scoped, tag = 'output window, operand 0, single buffered']
    %7 = vsyncpa [#allocation3], 0
    %8 = vsyncpa [#allocation6], 0
    %9 = vsyncpa [#allocation4], 0
    // Predicated region
    $region2: #{tpu_custom_call.1} parent=1 // pred_check
      _
    $region3: #{tpu_custom_call.1} parent=1 // pred_check_branch
      %11 = sbr.rel (0) target = $region5
    $region4: #{tpu_custom_call.1} parent=1 // pred_region
      %s13 = ssub.s32 512, 512
      %14 = vsyncadd [#allocation3], %s13
      %s15 = sshll.u32 [#allocation2], 4
      %s16 = int_to_ptr.vmem [resolvable:$true] %s15
      %21 = dma.hbm_to_vmem [thread:$0]  %s0, 512, %s16, [#allocation3], 128, 128, 8
    $region5: #{tpu_custom_call.1} parent=1 // pred_fallthru
      _
    // Predicated region
    $region6: #{tpu_custom_call.1} parent=1 // pred_check
      _
    $region7: #{tpu_custom_call.1} parent=1 // pred_check_branch
      %23 = sbr.rel (0) target = $region9
    $region8: #{tpu_custom_call.1} parent=1 // pred_region
      %s25 = ssub.s32 1920, 1920
      %26 = vsyncadd [#allocation6], %s25
      %s27 = sshll.u32 [#allocation5], 4
      %s28 = int_to_ptr.vmem [resolvable:$true] %s27
      %33 = dma.hbm_to_vmem [thread:$0]  %s1, 1920, %s28, [#allocation6], 128, 128, 8
    $region9: #{tpu_custom_call.1} parent=1 // pred_fallthru
      _
    // Predicated region
    $region10: #{tpu_custom_call.1} parent=1 // pred_check
      _
    $region11: #{tpu_custom_call.1} parent=1 // pred_check_branch
      %35 = sbr.rel (0) target = $region13
    $region12: #{tpu_custom_call.1} parent=1 // pred_region
      %36 = dma.done [#allocation3], 512
    $region13: #{tpu_custom_call.1} parent=1 // pred_fallthru
      _
    // Predicated region
    $region14: #{tpu_custom_call.1} parent=1 // pred_check
      _
    $region15: #{tpu_custom_call.1} parent=1 // pred_check_branch
      %38 = sbr.rel (0) target = $region17
    $region16: #{tpu_custom_call.1} parent=1 // pred_region
      %39 = dma.done [#allocation6], 1920
    $region17: #{tpu_custom_call.1} parent=1 // pred_fallthru
      _
    %v40 = vld [vmem:[#allocation2] sm:$0xff]
    %v41 = vld [vmem:[#allocation2 + $0x8] sm:$0xff]
    %v42 = vld [vmem:[#allocation2 + $0x10] sm:$0xff]
    %v43 = vld [vmem:[#allocation2 + $0x18] sm:$0xff]
    %v44 = vld [vmem:[#allocation5] sm:$0xff]
    %v45 = vld [vmem:[#allocation5 + $0x8] sm:$0xff]
    %v46 = vld [vmem:[#allocation5 + $0x10] sm:$0xff]
    %v47 = vld [vmem:[#allocation5 + $0x18] sm:$0xff]
    %v48 = vld [vmem:[#allocation5 + $0x20] sm:$0xff]
    %v49 = vld [vmem:[#allocation5 + $0x28] sm:$0xff]
    %v50 = vld [vmem:[#allocation5 + $0x30] sm:$0xff]
    %v51 = vld [vmem:[#allocation5 + $0x38] sm:$0xff]
    %v52 = vld [vmem:[#allocation5 + $0x40] sm:$0xff]
    %v53 = vld [vmem:[#allocation5 + $0x48] sm:$0xff]
    %v54 = vld [vmem:[#allocation5 + $0x50] sm:$0xff]
    %v55 = vld [vmem:[#allocation5 + $0x58] sm:$0xff]
    %v56 = vld [vmem:[#allocation5 + $0x60] sm:$0xff]
    %v57 = vld [vmem:[#allocation5 + $0x68] sm:$0x1]
    %v58 = vld [vmem:[#allocation5 + $0x70] sm:$0x1]
    %v59 = vlaneseq
    %v60 = vshrl.u32 %v59, 7
    %v61 = vsub.s32 0, %v60
    %v62 = vrot.slane %v57, %v61
    %vm63 = vcmask 261120
    %v65 = vsel %vm63, %v40, 0
    %v68 = vsel %vm63, %v41, 0
    %v71 = vsel %vm63, %v42, 0
    %v74 = vsel %vm63, %v43, 0
    %76 = vmatprep.subr.mxu0 0.0
    %77 = vmatpush1.msra.mxu0 0.0
    %78 = vmatprep.subr.mxu0 0.0
    %79 = vmatpush1.msra.mxu0 0.0
    %80 = vmatprep.subr.mxu0 0.0
    %81 = vmatpush1.msra.mxu0 0.0
    %82 = vmatprep.subr.mxu0 0.0
    %83 = vmatpush1.msra.mxu0 0.0
    %84 = vmatprep.subr.mxu0 0.0
    %85 = vmatpush1.msra.mxu0 0.0
    %86 = vmatprep.subr.mxu0 0.0
    %87 = vmatpush1.msra.mxu0 0.0
    %88 = vmatprep.subr.mxu0 0.0
    %89 = vmatpush1.msra.mxu0 0.0
    %90 = vmatprep.subr.mxu0 0.0
    %91 = vmatpush1.msra.mxu0 0.0
    %92 = vmatprep.subr.mxu0 0.0
    %93 = vmatpush1.msra.mxu0 0.0
    %94 = vmatprep.subr.mxu0 0.0
    %95 = vmatpush1.msra.mxu0 0.0
    %96 = vmatprep.subr.mxu0 0.0
    %97 = vmatpush1.msra.mxu0 0.0
    %98 = vmatprep.subr.mxu0 0.0
    %99 = vmatpush1.msra.mxu0 0.0
    %100 = vmatprep.subr.mxu0 0.0
    %101 = vmatpush1.msra.mxu0 %v48
    %102 = vmatprep.subr.mxu0 0.0
    %103 = vmatpush1.msra.mxu0 %v47
    %104 = vmatprep.subr.mxu0 0.0
    %105 = vmatpush1.msra.mxu0 %v46
    %106 = vmatprep.subr.mxu0 0.0
    %107 = vmatpush1.msra.mxu0 %v45
    %108 = vmatprep.subr.mxu0 0.0
    %109 = vmatpush2.msra.mxu0 0.0
    %110 = vmatprep.subr.mxu0 0.0
    %111 = vmatpush2.msra.mxu0 0.0
    %112 = vmatprep.subr.mxu0 0.0
    %113 = vmatpush2.msra.mxu0 0.0
    %114 = vmatprep.subr.mxu0 0.0
    %115 = vmatpush2.msra.mxu0 0.0
    %116 = vmatprep.subr.mxu0 0.0
    %117 = vmatpush2.msra.mxu0 0.0
    %118 = vmatprep.subr.mxu0 0.0
    %119 = vmatpush2.msra.mxu0 0.0
    %120 = vmatprep.subr.mxu0 0.0
    %121 = vmatpush2.msra.mxu0 0.0
    %122 = vmatprep.subr.mxu0 0.0
    %123 = vmatpush2.msra.mxu0 0.0
    %124 = vmatprep.subr.mxu0 0.0
    %125 = vmatpush2.msra.mxu0 0.0
    %126 = vmatprep.subr.mxu0 0.0
    %127 = vmatpush2.msra.mxu0 0.0
    %128 = vmatprep.subr.mxu0 0.0
    %129 = vmatpush2.msra.mxu0 0.0
    %130 = vmatprep.subr.mxu0 0.0
    %131 = vmatpush2.msra.mxu0 0.0
    %132 = vmatprep.subr.mxu0 0.0
    %133 = vmatpush2.msra.mxu0 0.0
    %134 = vmatprep.subr.mxu0 0.0
    %135 = vmatpush2.msra.mxu0 0.0
    %136 = vmatprep.subr.mxu0 0.0
    %137 = vmatpush2.msra.mxu0 0.0
    %138 = vmatprep.subr.mxu0 0.0
    %139 = vmatpush2.msra.mxu0 0.0
    %140 = vmatprep.mubr.f32.mxu0 0.0
    %141 = vmatmul.mubr.f32.gmra.mxu0 %v65
    %v142 = vpop.f32.mrf.mxu0
    %v143 = vadd.f32 %v62, %v142
    %v144 = vpop.f32.mrf.mxu0
    %145 = vmatprep.mubr.f32.mxu0 0.0
    %146 = vmatmul.mubr.f32.gmra.mxu0 %v68
    %v147 = vpop.f32.mrf.mxu0
    %v148 = vadd.f32 %v62, %v147
    %v149 = vpop.f32.mrf.mxu0
    %150 = vmatprep.mubr.f32.mxu0 0.0
    %151 = vmatmul.mubr.f32.gmra.mxu0 %v71
    %v152 = vpop.f32.mrf.mxu0
    %v153 = vadd.f32 %v62, %v152
    %v154 = vpop.f32.mrf.mxu0
    %155 = vmatprep.mubr.f32.mxu0 0.0
    %156 = vmatmul.mubr.f32.gmra.mxu0 %v74
    %v157 = vpop.f32.mrf.mxu0
    %v158 = vadd.f32 %v62, %v157
    %v159 = vpop.f32.mrf.mxu0
    %160 = vdwg.mxu0
    %vm161 = vcmask 130048
    %v163 = vsel %vm161, %v44, 0
    %v166 = vsel %vm161, %v143, 0
    %v169 = vsel %vm161, %v148, 0
    %171 = vmatprep.subr.mxu0 0.0
    %172 = vmatpush1.xpose.msra.mxu0 0.0
    %173 = vmatprep.subr.mxu0 0.0
    %174 = vmatpush1.xpose.msra.mxu0 0.0
    %175 = vmatprep.subr.mxu0 0.0
    %176 = vmatpush1.xpose.msra.mxu0 0.0
    %177 = vmatprep.subr.mxu0 0.0
    %178 = vmatpush1.xpose.msra.mxu0 0.0
    %179 = vmatprep.subr.mxu0 0.0
    %180 = vmatpush1.xpose.msra.mxu0 0.0
    %181 = vmatprep.subr.mxu0 0.0
    %182 = vmatpush1.xpose.msra.mxu0 0.0
    %183 = vmatprep.subr.mxu0 0.0
    %184 = vmatpush1.xpose.msra.mxu0 0.0
    %185 = vmatprep.subr.mxu0 0.0
    %186 = vmatpush1.xpose.msra.mxu0 0.0
    %187 = vmatprep.subr.mxu0 0.0
    %188 = vmatpush1.xpose.msra.mxu0 0.0
    %189 = vmatprep.subr.mxu0 0.0
    %190 = vmatpush1.xpose.msra.mxu0 0.0
    %191 = vmatprep.subr.mxu0 0.0
    %192 = vmatpush1.xpose.msra.mxu0 0.0
    %193 = vmatprep.subr.mxu0 0.0
    %194 = vmatpush1.xpose.msra.mxu0 0.0
    %195 = vmatprep.subr.mxu0 0.0
    %196 = vmatpush1.xpose.msra.mxu0 0.0
    %197 = vmatprep.subr.mxu0 0.0
    %198 = vmatpush1.xpose.msra.mxu0 0.0
    %199 = vmatprep.subr.mxu0 0.0
    %200 = vmatpush1.xpose.msra.mxu0 %v169
    %201 = vmatprep.subr.mxu0 0.0
    %202 = vmatpush1.xpose.msra.mxu0 %v166
    %203 = vmatprep.subr.mxu0 0.0
    %204 = vmatpush2.xpose.msra.mxu0 0.0
    %205 = vmatprep.subr.mxu0 0.0
    %206 = vmatpush2.xpose.msra.mxu0 0.0
    %207 = vmatprep.subr.mxu0 0.0
    %208 = vmatpush2.xpose.msra.mxu0 0.0
    %209 = vmatprep.subr.mxu0 0.0
    %210 = vmatpush2.xpose.msra.mxu0 0.0
    %211 = vmatprep.subr.mxu0 0.0
    %212 = vmatpush2.xpose.msra.mxu0 0.0
    %213 = vmatprep.subr.mxu0 0.0
    %214 = vmatpush2.xpose.msra.mxu0 0.0
    %215 = vmatprep.subr.mxu0 0.0
    %216 = vmatpush2.xpose.msra.mxu0 0.0
    %217 = vmatprep.subr.mxu0 0.0
    %218 = vmatpush2.xpose.msra.mxu0 0.0
    %219 = vmatprep.subr.mxu0 0.0
    %220 = vmatpush2.xpose.msra.mxu0 0.0
    %221 = vmatprep.subr.mxu0 0.0
    %222 = vmatpush2.xpose.msra.mxu0 0.0
    %223 = vmatprep.subr.mxu0 0.0
    %224 = vmatpush2.xpose.msra.mxu0 0.0
    %225 = vmatprep.subr.mxu0 0.0
    %226 = vmatpush2.xpose.msra.mxu0 0.0
    %227 = vmatprep.subr.mxu0 0.0
    %228 = vmatpush2.xpose.msra.mxu0 0.0
    %229 = vmatprep.subr.mxu0 0.0
    %230 = vmatpush2.xpose.msra.mxu0 0.0
    %231 = vmatprep.subr.mxu0 0.0
    %232 = vmatpush2.xpose.msra.mxu0 0.0
    %233 = vmatprep.subr.mxu0 0.0
    %234 = vmatpush2.xpose.msra.mxu0 0.0
    %235 = vmatprep.mubr.f32.mxu0 0.0
    %236 = vmatmul.mubr.f32.gmra.mxu0 %v163
    %v237 = vpop.f32.mrf.mxu0
    %v238 = vadd.f32 0.0, %v237
    %v239 = vpop.f32.mrf.mxu0
    %240 = vdwg.mxu0
    %v241 = vmul.f32 %v238, 0.25
    %v242 = vsel %vm161, %v241, -inf
    %243 = vmax.xlane.f32.xlu0 %v242
    %v244 = vpop.xlane.xlu0 %243
    %v245 = vsub.f32 %v241, %v244
    %v246 = vmul.f32 %v245, 1.442695
    %v247 = vpow.pop %v246
    %v248 = vsel %vm161, %v247, 0.0
    %249 = vadd.xlane.f32.xlu0 %v248
    %v250 = vpop.xlane.xlu0 %249
    %v251 = vrcp.pop %v250
    %v252 = vmul.f32 %v247, %v251
    %253 = vrot.lane.b32.xlu0 %v143, 64
    %v254 = vpop.permute.xlu0 %253
    %255 = vrot.lane.b32.xlu0 %v148, 64
    %v256 = vpop.permute.xlu0 %255
    %v260 = vsel %vm161, %v252, 0
    %262 = vmatprep.subr.mxu0 0.0
    %263 = vmatpush1.msra.mxu0 0.0
    %264 = vmatprep.subr.mxu0 0.0
    %265 = vmatpush1.msra.mxu0 0.0
    %266 = vmatprep.subr.mxu0 0.0
    %267 = vmatpush1.msra.mxu0 0.0
    %268 = vmatprep.subr.mxu0 0.0
    %269 = vmatpush1.msra.mxu0 0.0
    %270 = vmatprep.subr.mxu0 0.0
    %271 = vmatpush1.msra.mxu0 0.0
    %272 = vmatprep.subr.mxu0 0.0
    %273 = vmatpush1.msra.mxu0 0.0
    %274 = vmatprep.subr.mxu0 0.0
    %275 = vmatpush1.msra.mxu0 0.0
    %276 = vmatprep.subr.mxu0 0.0
    %277 = vmatpush1.msra.mxu0 0.0
    %278 = vmatprep.subr.mxu0 0.0
    %279 = vmatpush1.msra.mxu0 0.0
    %280 = vmatprep.subr.mxu0 0.0
    %281 = vmatpush1.msra.mxu0 0.0
    %282 = vmatprep.subr.mxu0 0.0
    %283 = vmatpush1.msra.mxu0 0.0
    %284 = vmatprep.subr.mxu0 0.0
    %285 = vmatpush1.msra.mxu0 0.0
    %286 = vmatprep.subr.mxu0 0.0
    %287 = vmatpush1.msra.mxu0 0.0
    %288 = vmatprep.subr.mxu0 0.0
    %289 = vmatpush1.msra.mxu0 0.0
    %290 = vmatprep.subr.mxu0 0.0
    %291 = vmatpush1.msra.mxu0 %v256
    %292 = vmatprep.subr.mxu0 0.0
    %293 = vmatpush1.msra.mxu0 %v254
    %294 = vmatprep.subr.mxu0 0.0
    %295 = vmatpush2.msra.mxu0 0.0
    %296 = vmatprep.subr.mxu0 0.0
    %297 = vmatpush2.msra.mxu0 0.0
    %298 = vmatprep.subr.mxu0 0.0
    %299 = vmatpush2.msra.mxu0 0.0
    %300 = vmatprep.subr.mxu0 0.0
    %301 = vmatpush2.msra.mxu0 0.0
    %302 = vmatprep.subr.mxu0 0.0
    %303 = vmatpush2.msra.mxu0 0.0
    %304 = vmatprep.subr.mxu0 0.0
    %305 = vmatpush2.msra.mxu0 0.0
    %306 = vmatprep.subr.mxu0 0.0
    %307 = vmatpush2.msra.mxu0 0.0
    %308 = vmatprep.subr.mxu0 0.0
    %309 = vmatpush2.msra.mxu0 0.0
    %310 = vmatprep.subr.mxu0 0.0
    %311 = vmatpush2.msra.mxu0 0.0
    %312 = vmatprep.subr.mxu0 0.0
    %313 = vmatpush2.msra.mxu0 0.0
    %314 = vmatprep.subr.mxu0 0.0
    %315 = vmatpush2.msra.mxu0 0.0
    %316 = vmatprep.subr.mxu0 0.0
    %317 = vmatpush2.msra.mxu0 0.0
    %318 = vmatprep.subr.mxu0 0.0
    %319 = vmatpush2.msra.mxu0 0.0
    %320 = vmatprep.subr.mxu0 0.0
    %321 = vmatpush2.msra.mxu0 0.0
    %322 = vmatprep.subr.mxu0 0.0
    %323 = vmatpush2.msra.mxu0 0.0
    %324 = vmatprep.subr.mxu0 0.0
    %325 = vmatpush2.msra.mxu0 0.0
    %326 = vmatprep.mubr.f32.mxu0 0.0
    %327 = vmatmul.mubr.f32.gmra.mxu0 %v260
    %v328 = vpop.f32.mrf.mxu0
    %v329 = vadd.f32 0.0, %v328
    %v330 = vpop.f32.mrf.mxu0
    %331 = vdwg.mxu0
    %332 = vrot.lane.b32.xlu0 %v44, 112
    %v333 = vpop.permute.xlu0 %332
    %334 = vrot.lane.b32.xlu0 %v143, 112
    %v335 = vpop.permute.xlu0 %334
    %336 = vrot.lane.b32.xlu0 %v148, 112
    %v337 = vpop.permute.xlu0 %336
    %v338 = vsel %vm161, %v333, 0
    %v340 = vsel %vm161, %v335, 0
    %v342 = vsel %vm161, %v337, 0
    %344 = vmatprep.subr.mxu0 0.0
    %345 = vmatpush1.xpose.msra.mxu0 0.0
    %346 = vmatprep.subr.mxu0 0.0
    %347 = vmatpush1.xpose.msra.mxu0 0.0
    %348 = vmatprep.subr.mxu0 0.0
    %349 = vmatpush1.xpose.msra.mxu0 0.0
    %350 = vmatprep.subr.mxu0 0.0
    %351 = vmatpush1.xpose.msra.mxu0 0.0
    %352 = vmatprep.subr.mxu0 0.0
    %353 = vmatpush1.xpose.msra.mxu0 0.0
    %354 = vmatprep.subr.mxu0 0.0
    %355 = vmatpush1.xpose.msra.mxu0 0.0
    %356 = vmatprep.subr.mxu0 0.0
    %357 = vmatpush1.xpose.msra.mxu0 0.0
    %358 = vmatprep.subr.mxu0 0.0
    %359 = vmatpush1.xpose.msra.mxu0 0.0
    %360 = vmatprep.subr.mxu0 0.0
    %361 = vmatpush1.xpose.msra.mxu0 0.0
    %362 = vmatprep.subr.mxu0 0.0
    %363 = vmatpush1.xpose.msra.mxu0 0.0
    %364 = vmatprep.subr.mxu0 0.0
    %365 = vmatpush1.xpose.msra.mxu0 0.0
    %366 = vmatprep.subr.mxu0 0.0
    %367 = vmatpush1.xpose.msra.mxu0 0.0
    %368 = vmatprep.subr.mxu0 0.0
    %369 = vmatpush1.xpose.msra.mxu0 0.0
    %370 = vmatprep.subr.mxu0 0.0
    %371 = vmatpush1.xpose.msra.mxu0 0.0
    %372 = vmatprep.subr.mxu0 0.0
    %373 = vmatpush1.xpose.msra.mxu0 %v342
    %374 = vmatprep.subr.mxu0 0.0
    %375 = vmatpush1.xpose.msra.mxu0 %v340
    %376 = vmatprep.subr.mxu0 0.0
    %377 = vmatpush2.xpose.msra.mxu0 0.0
    %378 = vmatprep.subr.mxu0 0.0
    %379 = vmatpush2.xpose.msra.mxu0 0.0
    %380 = vmatprep.subr.mxu0 0.0
    %381 = vmatpush2.xpose.msra.mxu0 0.0
    %382 = vmatprep.subr.mxu0 0.0
    %383 = vmatpush2.xpose.msra.mxu0 0.0
    %384 = vmatprep.subr.mxu0 0.0
    %385 = vmatpush2.xpose.msra.mxu0 0.0
    %386 = vmatprep.subr.mxu0 0.0
    %387 = vmatpush2.xpose.msra.mxu0 0.0
    %388 = vmatprep.subr.mxu0 0.0
    %389 = vmatpush2.xpose.msra.mxu0 0.0
    %390 = vmatprep.subr.mxu0 0.0
    %391 = vmatpush2.xpose.msra.mxu0 0.0
    %392 = vmatprep.subr.mxu0 0.0
    %393 = vmatpush2.xpose.msra.mxu0 0.0
    %394 = vmatprep.subr.mxu0 0.0
    %395 = vmatpush2.xpose.msra.mxu0 0.0
    %396 = vmatprep.subr.mxu0 0.0
    %397 = vmatpush2.xpose.msra.mxu0 0.0
    %398 = vmatprep.subr.mxu0 0.0
    %399 = vmatpush2.xpose.msra.mxu0 0.0
    %400 = vmatprep.subr.mxu0 0.0
    %401 = vmatpush2.xpose.msra.mxu0 0.0
    %402 = vmatprep.subr.mxu0 0.0
    %403 = vmatpush2.xpose.msra.mxu0 0.0
    %404 = vmatprep.subr.mxu0 0.0
    %405 = vmatpush2.xpose.msra.mxu0 0.0
    %406 = vmatprep.subr.mxu0 0.0
    %407 = vmatpush2.xpose.msra.mxu0 0.0
    %408 = vmatprep.mubr.f32.mxu0 0.0
    %409 = vmatmul.mubr.f32.gmra.mxu0 %v338
    %v410 = vpop.f32.mrf.mxu0
    %v411 = vadd.f32 0.0, %v410
    %v412 = vpop.f32.mrf.mxu0
    %413 = vdwg.mxu0
    %v414 = vmul.f32 %v411, 0.25
    %v415 = vsel %vm161, %v414, -inf
    %416 = vmax.xlane.f32.xlu0 %v415
    %v417 = vpop.xlane.xlu0 %416
    %v418 = vsub.f32 %v414, %v417
    %v419 = vmul.f32 %v418, 1.442695
    %v420 = vpow.pop %v419
    %v421 = vsel %vm161, %v420, 0.0
    %422 = vadd.xlane.f32.xlu0 %v421
    %v423 = vpop.xlane.xlu0 %422
    %v424 = vrcp.pop %v423
    %v425 = vmul.f32 %v420, %v424
    %426 = vrot.lane.b32.xlu0 %v143, 48
    %v427 = vpop.permute.xlu0 %426
    %428 = vrot.lane.b32.xlu0 %v148, 48
    %v429 = vpop.permute.xlu0 %428
    %v433 = vsel %vm161, %v425, 0
    %435 = vmatprep.subr.mxu0 0.0
    %436 = vmatpush1.msra.mxu0 0.0
    %437 = vmatprep.subr.mxu0 0.0
    %438 = vmatpush1.msra.mxu0 0.0
    %439 = vmatprep.subr.mxu0 0.0
    %440 = vmatpush1.msra.mxu0 0.0
    %441 = vmatprep.subr.mxu0 0.0
    %442 = vmatpush1.msra.mxu0 0.0
    %443 = vmatprep.subr.mxu0 0.0
    %444 = vmatpush1.msra.mxu0 0.0
    %445 = vmatprep.subr.mxu0 0.0
    %446 = vmatpush1.msra.mxu0 0.0
    %447 = vmatprep.subr.mxu0 0.0
    %448 = vmatpush1.msra.mxu0 0.0
    %449 = vmatprep.subr.mxu0 0.0
    %450 = vmatpush1.msra.mxu0 0.0
    %451 = vmatprep.subr.mxu0 0.0
    %452 = vmatpush1.msra.mxu0 0.0
    %453 = vmatprep.subr.mxu0 0.0
    %454 = vmatpush1.msra.mxu0 0.0
    %455 = vmatprep.subr.mxu0 0.0
    %456 = vmatpush1.msra.mxu0 0.0
    %457 = vmatprep.subr.mxu0 0.0
    %458 = vmatpush1.msra.mxu0 0.0
    %459 = vmatprep.subr.mxu0 0.0
    %460 = vmatpush1.msra.mxu0 0.0
    %461 = vmatprep.subr.mxu0 0.0
    %462 = vmatpush1.msra.mxu0 0.0
    %463 = vmatprep.subr.mxu0 0.0
    %464 = vmatpush1.msra.mxu0 %v429
    %465 = vmatprep.subr.mxu0 0.0
    %466 = vmatpush1.msra.mxu0 %v427
    %467 = vmatprep.subr.mxu0 0.0
    %468 = vmatpush2.msra.mxu0 0.0
    %469 = vmatprep.subr.mxu0 0.0
    %470 = vmatpush2.msra.mxu0 0.0
    %471 = vmatprep.subr.mxu0 0.0
    %472 = vmatpush2.msra.mxu0 0.0
    %473 = vmatprep.subr.mxu0 0.0
    %474 = vmatpush2.msra.mxu0 0.0
    %475 = vmatprep.subr.mxu0 0.0
    %476 = vmatpush2.msra.mxu0 0.0
    %477 = vmatprep.subr.mxu0 0.0
    %478 = vmatpush2.msra.mxu0 0.0
    %479 = vmatprep.subr.mxu0 0.0
    %480 = vmatpush2.msra.mxu0 0.0
    %481 = vmatprep.subr.mxu0 0.0
    %482 = vmatpush2.msra.mxu0 0.0
    %483 = vmatprep.subr.mxu0 0.0
    %484 = vmatpush2.msra.mxu0 0.0
    %485 = vmatprep.subr.mxu0 0.0
    %486 = vmatpush2.msra.mxu0 0.0
    %487 = vmatprep.subr.mxu0 0.0
    %488 = vmatpush2.msra.mxu0 0.0
    %489 = vmatprep.subr.mxu0 0.0
    %490 = vmatpush2.msra.mxu0 0.0
    %491 = vmatprep.subr.mxu0 0.0
    %492 = vmatpush2.msra.mxu0 0.0
    %493 = vmatprep.subr.mxu0 0.0
    %494 = vmatpush2.msra.mxu0 0.0
    %495 = vmatprep.subr.mxu0 0.0
    %496 = vmatpush2.msra.mxu0 0.0
    %497 = vmatprep.subr.mxu0 0.0
    %498 = vmatpush2.msra.mxu0 0.0
    %499 = vmatprep.mubr.f32.mxu0 0.0
    %500 = vmatmul.mubr.f32.gmra.mxu0 %v433
    %v501 = vpop.f32.mrf.mxu0
    %v502 = vadd.f32 0.0, %v501
    %v503 = vpop.f32.mrf.mxu0
    %504 = vdwg.mxu0
    %505 = vrot.lane.b32.xlu0 %v44, 96
    %v506 = vpop.permute.xlu0 %505
    %507 = vrot.lane.b32.xlu0 %v143, 96
    %v508 = vpop.permute.xlu0 %507
    %509 = vrot.lane.b32.xlu0 %v148, 96
    %v510 = vpop.permute.xlu0 %509
    %v511 = vsel %vm161, %v506, 0
    %v513 = vsel %vm161, %v508, 0
    %v515 = vsel %vm161, %v510, 0
    %517 = vmatprep.subr.mxu0 0.0
    %518 = vmatpush1.xpose.msra.mxu0 0.0
    %519 = vmatprep.subr.mxu0 0.0
    %520 = vmatpush1.xpose.msra.mxu0 0.0
    %521 = vmatprep.subr.mxu0 0.0
    %522 = vmatpush1.xpose.msra.mxu0 0.0
    %523 = vmatprep.subr.mxu0 0.0
    %524 = vmatpush1.xpose.msra.mxu0 0.0
    %525 = vmatprep.subr.mxu0 0.0
    %526 = vmatpush1.xpose.msra.mxu0 0.0
    %527 = vmatprep.subr.mxu0 0.0
    %528 = vmatpush1.xpose.msra.mxu0 0.0
    %529 = vmatprep.subr.mxu0 0.0
    %530 = vmatpush1.xpose.msra.mxu0 0.0
    %531 = vmatprep.subr.mxu0 0.0
    %532 = vmatpush1.xpose.msra.mxu0 0.0
    %533 = vmatprep.subr.mxu0 0.0
    %534 = vmatpush1.xpose.msra.mxu0 0.0
    %535 = vmatprep.subr.mxu0 0.0
    %536 = vmatpush1.xpose.msra.mxu0 0.0
    %537 = vmatprep.subr.mxu0 0.0
    %538 = vmatpush1.xpose.msra.mxu0 0.0
    %539 = vmatprep.subr.mxu0 0.0
    %540 = vmatpush1.xpose.msra.mxu0 0.0
    %541 = vmatprep.subr.mxu0 0.0
    %542 = vmatpush1.xpose.msra.mxu0 0.0
    %543 = vmatprep.subr.mxu0 0.0
    %544 = vmatpush1.xpose.msra.mxu0 0.0
    %545 = vmatprep.subr.mxu0 0.0
    %546 = vmatpush1.xpose.msra.mxu0 %v515
    %547 = vmatprep.subr.mxu0 0.0
    %548 = vmatpush1.xpose.msra.mxu0 %v513
    %549 = vmatprep.subr.mxu0 0.0
    %550 = vmatpush2.xpose.msra.mxu0 0.0
    %551 = vmatprep.subr.mxu0 0.0
    %552 = vmatpush2.xpose.msra.mxu0 0.0
    %553 = vmatprep.subr.mxu0 0.0
    %554 = vmatpush2.xpose.msra.mxu0 0.0
    %555 = vmatprep.subr.mxu0 0.0
    %556 = vmatpush2.xpose.msra.mxu0 0.0
    %557 = vmatprep.subr.mxu0 0.0
    %558 = vmatpush2.xpose.msra.mxu0 0.0
    %559 = vmatprep.subr.mxu0 0.0
    %560 = vmatpush2.xpose.msra.mxu0 0.0
    %561 = vmatprep.subr.mxu0 0.0
    %562 = vmatpush2.xpose.msra.mxu0 0.0
    %563 = vmatprep.subr.mxu0 0.0
    %564 = vmatpush2.xpose.msra.mxu0 0.0
    %565 = vmatprep.subr.mxu0 0.0
    %566 = vmatpush2.xpose.msra.mxu0 0.0
    %567 = vmatprep.subr.mxu0 0.0
    %568 = vmatpush2.xpose.msra.mxu0 0.0
    %569 = vmatprep.subr.mxu0 0.0
    %570 = vmatpush2.xpose.msra.mxu0 0.0
    %571 = vmatprep.subr.mxu0 0.0
    %572 = vmatpush2.xpose.msra.mxu0 0.0
    %573 = vmatprep.subr.mxu0 0.0
    %574 = vmatpush2.xpose.msra.mxu0 0.0
    %575 = vmatprep.subr.mxu0 0.0
    %576 = vmatpush2.xpose.msra.mxu0 0.0
    %577 = vmatprep.subr.mxu0 0.0
    %578 = vmatpush2.xpose.msra.mxu0 0.0
    %579 = vmatprep.subr.mxu0 0.0
    %580 = vmatpush2.xpose.msra.mxu0 0.0
    %581 = vmatprep.mubr.f32.mxu0 0.0
    %582 = vmatmul.mubr.f32.gmra.mxu0 %v511
    %v583 = vpop.f32.mrf.mxu0
    %v584 = vadd.f32 0.0, %v583
    %v585 = vpop.f32.mrf.mxu0
    %586 = vdwg.mxu0
    %v587 = vmul.f32 %v584, 0.25
    %v588 = vsel %vm161, %v587, -inf
    %589 = vmax.xlane.f32.xlu0 %v588
    %v590 = vpop.xlane.xlu0 %589
    %v591 = vsub.f32 %v587, %v590
    %v592 = vmul.f32 %v591, 1.442695
    %v593 = vpow.pop %v592
    %v594 = vsel %vm161, %v593, 0.0
    %595 = vadd.xlane.f32.xlu0 %v594
    %v596 = vpop.xlane.xlu0 %595
    %v597 = vrcp.pop %v596
    %v598 = vmul.f32 %v593, %v597
    %599 = vrot.lane.b32.xlu0 %v143, 32
    %v600 = vpop.permute.xlu0 %599
    %601 = vrot.lane.b32.xlu0 %v148, 32
    %v602 = vpop.permute.xlu0 %601
    %v606 = vsel %vm161, %v598, 0
    %608 = vmatprep.subr.mxu0 0.0
    %609 = vmatpush1.msra.mxu0 0.0
    %610 = vmatprep.subr.mxu0 0.0
    %611 = vmatpush1.msra.mxu0 0.0
    %612 = vmatprep.subr.mxu0 0.0
    %613 = vmatpush1.msra.mxu0 0.0
    %614 = vmatprep.subr.mxu0 0.0
    %615 = vmatpush1.msra.mxu0 0.0
    %616 = vmatprep.subr.mxu0 0.0
    %617 = vmatpush1.msra.mxu0 0.0
    %618 = vmatprep.subr.mxu0 0.0
    %619 = vmatpush1.msra.mxu0 0.0
    %620 = vmatprep.subr.mxu0 0.0
    %621 = vmatpush1.msra.mxu0 0.0
    %622 = vmatprep.subr.mxu0 0.0
    %623 = vmatpush1.msra.mxu0 0.0
    %624 = vmatprep.subr.mxu0 0.0
    %625 = vmatpush1.msra.mxu0 0.0
    %626 = vmatprep.subr.mxu0 0.0
    %627 = vmatpush1.msra.mxu0 0.0
    %628 = vmatprep.subr.mxu0 0.0
    %629 = vmatpush1.msra.mxu0 0.0
    %630 = vmatprep.subr.mxu0 0.0
    %631 = vmatpush1.msra.mxu0 0.0
    %632 = vmatprep.subr.mxu0 0.0
    %633 = vmatpush1.msra.mxu0 0.0
    %634 = vmatprep.subr.mxu0 0.0
    %635 = vmatpush1.msra.mxu0 0.0
    %636 = vmatprep.subr.mxu0 0.0
    %637 = vmatpush1.msra.mxu0 %v602
    %638 = vmatprep.subr.mxu0 0.0
    %639 = vmatpush1.msra.mxu0 %v600
    %640 = vmatprep.subr.mxu0 0.0
    %641 = vmatpush2.msra.mxu0 0.0
    %642 = vmatprep.subr.mxu0 0.0
    %643 = vmatpush2.msra.mxu0 0.0
    %644 = vmatprep.subr.mxu0 0.0
    %645 = vmatpush2.msra.mxu0 0.0
    %646 = vmatprep.subr.mxu0 0.0
    %647 = vmatpush2.msra.mxu0 0.0
    %648 = vmatprep.subr.mxu0 0.0
    %649 = vmatpush2.msra.mxu0 0.0
    %650 = vmatprep.subr.mxu0 0.0
    %651 = vmatpush2.msra.mxu0 0.0
    %652 = vmatprep.subr.mxu0 0.0
    %653 = vmatpush2.msra.mxu0 0.0
    %654 = vmatprep.subr.mxu0 0.0
    %655 = vmatpush2.msra.mxu0 0.0
    %656 = vmatprep.subr.mxu0 0.0
    %657 = vmatpush2.msra.mxu0 0.0
    %658 = vmatprep.subr.mxu0 0.0
    %659 = vmatpush2.msra.mxu0 0.0
    %660 = vmatprep.subr.mxu0 0.0
    %661 = vmatpush2.msra.mxu0 0.0
    %662 = vmatprep.subr.mxu0 0.0
    %663 = vmatpush2.msra.mxu0 0.0
    %664 = vmatprep.subr.mxu0 0.0
    %665 = vmatpush2.msra.mxu0 0.0
    %666 = vmatprep.subr.mxu0 0.0
    %667 = vmatpush2.msra.mxu0 0.0
    %668 = vmatprep.subr.mxu0 0.0
    %669 = vmatpush2.msra.mxu0 0.0
    %670 = vmatprep.subr.mxu0 0.0
    %671 = vmatpush2.msra.mxu0 0.0
    %672 = vmatprep.mubr.f32.mxu0 0.0
    %673 = vmatmul.mubr.f32.gmra.mxu0 %v606
    %v674 = vpop.f32.mrf.mxu0
    %v675 = vadd.f32 0.0, %v674
    %v676 = vpop.f32.mrf.mxu0
    %677 = vdwg.mxu0
    %678 = vrot.lane.b32.xlu0 %v44, 80
    %v679 = vpop.permute.xlu0 %678
    %680 = vrot.lane.b32.xlu0 %v143, 80
    %v681 = vpop.permute.xlu0 %680
    %682 = vrot.lane.b32.xlu0 %v148, 80
    %v683 = vpop.permute.xlu0 %682
    %v684 = vsel %vm161, %v679, 0
    %v686 = vsel %vm161, %v681, 0
    %v688 = vsel %vm161, %v683, 0
    %690 = vmatprep.subr.mxu0 0.0
    %691 = vmatpush1.xpose.msra.mxu0 0.0
    %692 = vmatprep.subr.mxu0 0.0
    %693 = vmatpush1.xpose.msra.mxu0 0.0
    %694 = vmatprep.subr.mxu0 0.0
    %695 = vmatpush1.xpose.msra.mxu0 0.0
    %696 = vmatprep.subr.mxu0 0.0
    %697 = vmatpush1.xpose.msra.mxu0 0.0
    %698 = vmatprep.subr.mxu0 0.0
    %699 = vmatpush1.xpose.msra.mxu0 0.0
    %700 = vmatprep.subr.mxu0 0.0
    %701 = vmatpush1.xpose.msra.mxu0 0.0
    %702 = vmatprep.subr.mxu0 0.0
    %703 = vmatpush1.xpose.msra.mxu0 0.0
    %704 = vmatprep.subr.mxu0 0.0
    %705 = vmatpush1.xpose.msra.mxu0 0.0
    %706 = vmatprep.subr.mxu0 0.0
    %707 = vmatpush1.xpose.msra.mxu0 0.0
    %708 = vmatprep.subr.mxu0 0.0
    %709 = vmatpush1.xpose.msra.mxu0 0.0
    %710 = vmatprep.subr.mxu0 0.0
    %711 = vmatpush1.xpose.msra.mxu0 0.0
    %712 = vmatprep.subr.mxu0 0.0
    %713 = vmatpush1.xpose.msra.mxu0 0.0
    %714 = vmatprep.subr.mxu0 0.0
    %715 = vmatpush1.xpose.msra.mxu0 0.0
    %716 = vmatprep.subr.mxu0 0.0
    %717 = vmatpush1.xpose.msra.mxu0 0.0
    %718 = vmatprep.subr.mxu0 0.0
    %719 = vmatpush1.xpose.msra.mxu0 %v688
    %720 = vmatprep.subr.mxu0 0.0
    %721 = vmatpush1.xpose.msra.mxu0 %v686
    %722 = vmatprep.subr.mxu0 0.0
    %723 = vmatpush2.xpose.msra.mxu0 0.0
    %724 = vmatprep.subr.mxu0 0.0
    %725 = vmatpush2.xpose.msra.mxu0 0.0
    %726 = vmatprep.subr.mxu0 0.0
    %727 = vmatpush2.xpose.msra.mxu0 0.0
    %728 = vmatprep.subr.mxu0 0.0
    %729 = vmatpush2.xpose.msra.mxu0 0.0
    %730 = vmatprep.subr.mxu0 0.0
    %731 = vmatpush2.xpose.msra.mxu0 0.0
    %732 = vmatprep.subr.mxu0 0.0
    %733 = vmatpush2.xpose.msra.mxu0 0.0
    %734 = vmatprep.subr.mxu0 0.0
    %735 = vmatpush2.xpose.msra.mxu0 0.0
    %736 = vmatprep.subr.mxu0 0.0
    %737 = vmatpush2.xpose.msra.mxu0 0.0
    %738 = vmatprep.subr.mxu0 0.0
    %739 = vmatpush2.xpose.msra.mxu0 0.0
    %740 = vmatprep.subr.mxu0 0.0
    %741 = vmatpush2.xpose.msra.mxu0 0.0
    %742 = vmatprep.subr.mxu0 0.0
    %743 = vmatpush2.xpose.msra.mxu0 0.0
    %744 = vmatprep.subr.mxu0 0.0
    %745 = vmatpush2.xpose.msra.mxu0 0.0
    %746 = vmatprep.subr.mxu0 0.0
    %747 = vmatpush2.xpose.msra.mxu0 0.0
    %748 = vmatprep.subr.mxu0 0.0
    %749 = vmatpush2.xpose.msra.mxu0 0.0
    %750 = vmatprep.subr.mxu0 0.0
    %751 = vmatpush2.xpose.msra.mxu0 0.0
    %752 = vmatprep.subr.mxu0 0.0
    %753 = vmatpush2.xpose.msra.mxu0 0.0
    %754 = vmatprep.mubr.f32.mxu0 0.0
    %755 = vmatmul.mubr.f32.gmra.mxu0 %v684
    %v756 = vpop.f32.mrf.mxu0
    %v757 = vadd.f32 0.0, %v756
    %v758 = vpop.f32.mrf.mxu0
    %759 = vdwg.mxu0
    %v760 = vmul.f32 %v757, 0.25
    %v761 = vsel %vm161, %v760, -inf
    %762 = vmax.xlane.f32.xlu0 %v761
    %v763 = vpop.xlane.xlu0 %762
    %v764 = vsub.f32 %v760, %v763
    %v765 = vmul.f32 %v764, 1.442695
    %v766 = vpow.pop %v765
    %v767 = vsel %vm161, %v766, 0.0
    %768 = vadd.xlane.f32.xlu0 %v767
    %v769 = vpop.xlane.xlu0 %768
    %v770 = vrcp.pop %v769
    %v771 = vmul.f32 %v766, %v770
    %772 = vrot.lane.b32.xlu0 %v143, 16
    %v773 = vpop.permute.xlu0 %772
    %774 = vrot.lane.b32.xlu0 %v148, 16
    %v775 = vpop.permute.xlu0 %774
    %v779 = vsel %vm161, %v771, 0
    %781 = vmatprep.subr.mxu0 0.0
    %782 = vmatpush1.msra.mxu0 0.0
    %783 = vmatprep.subr.mxu0 0.0
    %784 = vmatpush1.msra.mxu0 0.0
    %785 = vmatprep.subr.mxu0 0.0
    %786 = vmatpush1.msra.mxu0 0.0
    %787 = vmatprep.subr.mxu0 0.0
    %788 = vmatpush1.msra.mxu0 0.0
    %789 = vmatprep.subr.mxu0 0.0
    %790 = vmatpush1.msra.mxu0 0.0
    %791 = vmatprep.subr.mxu0 0.0
    %792 = vmatpush1.msra.mxu0 0.0
    %793 = vmatprep.subr.mxu0 0.0
    %794 = vmatpush1.msra.mxu0 0.0
    %795 = vmatprep.subr.mxu0 0.0
    %796 = vmatpush1.msra.mxu0 0.0
    %797 = vmatprep.subr.mxu0 0.0
    %798 = vmatpush1.msra.mxu0 0.0
    %799 = vmatprep.subr.mxu0 0.0
    %800 = vmatpush1.msra.mxu0 0.0
    %801 = vmatprep.subr.mxu0 0.0
    %802 = vmatpush1.msra.mxu0 0.0
    %803 = vmatprep.subr.mxu0 0.0
    %804 = vmatpush1.msra.mxu0 0.0
    %805 = vmatprep.subr.mxu0 0.0
    %806 = vmatpush1.msra.mxu0 0.0
    %807 = vmatprep.subr.mxu0 0.0
    %808 = vmatpush1.msra.mxu0 0.0
    %809 = vmatprep.subr.mxu0 0.0
    %810 = vmatpush1.msra.mxu0 %v775
    %811 = vmatprep.subr.mxu0 0.0
    %812 = vmatpush1.msra.mxu0 %v773
    %813 = vmatprep.subr.mxu0 0.0
    %814 = vmatpush2.msra.mxu0 0.0
    %815 = vmatprep.subr.mxu0 0.0
    %816 = vmatpush2.msra.mxu0 0.0
    %817 = vmatprep.subr.mxu0 0.0
    %818 = vmatpush2.msra.mxu0 0.0
    %819 = vmatprep.subr.mxu0 0.0
    %820 = vmatpush2.msra.mxu0 0.0
    %821 = vmatprep.subr.mxu0 0.0
    %822 = vmatpush2.msra.mxu0 0.0
    %823 = vmatprep.subr.mxu0 0.0
    %824 = vmatpush2.msra.mxu0 0.0
    %825 = vmatprep.subr.mxu0 0.0
    %826 = vmatpush2.msra.mxu0 0.0
    %827 = vmatprep.subr.mxu0 0.0
    %828 = vmatpush2.msra.mxu0 0.0
    %829 = vmatprep.subr.mxu0 0.0
    %830 = vmatpush2.msra.mxu0 0.0
    %831 = vmatprep.subr.mxu0 0.0
    %832 = vmatpush2.msra.mxu0 0.0
    %833 = vmatprep.subr.mxu0 0.0
    %834 = vmatpush2.msra.mxu0 0.0
    %835 = vmatprep.subr.mxu0 0.0
    %836 = vmatpush2.msra.mxu0 0.0
    %837 = vmatprep.subr.mxu0 0.0
    %838 = vmatpush2.msra.mxu0 0.0
    %839 = vmatprep.subr.mxu0 0.0
    %840 = vmatpush2.msra.mxu0 0.0
    %841 = vmatprep.subr.mxu0 0.0
    %842 = vmatpush2.msra.mxu0 0.0
    %843 = vmatprep.subr.mxu0 0.0
    %844 = vmatpush2.msra.mxu0 0.0
    %845 = vmatprep.mubr.f32.mxu0 0.0
    %846 = vmatmul.mubr.f32.gmra.mxu0 %v779
    %v847 = vpop.f32.mrf.mxu0
    %v848 = vadd.f32 0.0, %v847
    %v849 = vpop.f32.mrf.mxu0
    %850 = vdwg.mxu0
    %852 = vrot.lane.b32.xlu0 %v502, 16
    %v853 = vpop.permute.xlu0 %852
    %856 = vrot.lane.b32.xlu0 %v675, 32
    %v857 = vpop.permute.xlu0 %856
    %860 = vrot.lane.b32.xlu0 %v848, 48
    %v861 = vpop.permute.xlu0 %860
    %v863 = vsel %vm161, %v329, %v853
    %v864 = vsel %vm63, %v863, %v857
    %vm865 = vcmask 392192
    %v866 = vsel %vm865, %v864, %v861
    %v868 = vsel %vm161, %v153, 0
    %v871 = vsel %vm161, %v158, 0
    %873 = vmatprep.subr.mxu0 0.0
    %874 = vmatpush1.xpose.msra.mxu0 0.0
    %875 = vmatprep.subr.mxu0 0.0
    %876 = vmatpush1.xpose.msra.mxu0 0.0
    %877 = vmatprep.subr.mxu0 0.0
    %878 = vmatpush1.xpose.msra.mxu0 0.0
    %879 = vmatprep.subr.mxu0 0.0
    %880 = vmatpush1.xpose.msra.mxu0 0.0
    %881 = vmatprep.subr.mxu0 0.0
    %882 = vmatpush1.xpose.msra.mxu0 0.0
    %883 = vmatprep.subr.mxu0 0.0
    %884 = vmatpush1.xpose.msra.mxu0 0.0
    %885 = vmatprep.subr.mxu0 0.0
    %886 = vmatpush1.xpose.msra.mxu0 0.0
    %887 = vmatprep.subr.mxu0 0.0
    %888 = vmatpush1.xpose.msra.mxu0 0.0
    %889 = vmatprep.subr.mxu0 0.0
    %890 = vmatpush1.xpose.msra.mxu0 0.0
    %891 = vmatprep.subr.mxu0 0.0
    %892 = vmatpush1.xpose.msra.mxu0 0.0
    %893 = vmatprep.subr.mxu0 0.0
    %894 = vmatpush1.xpose.msra.mxu0 0.0
    %895 = vmatprep.subr.mxu0 0.0
    %896 = vmatpush1.xpose.msra.mxu0 0.0
    %897 = vmatprep.subr.mxu0 0.0
    %898 = vmatpush1.xpose.msra.mxu0 0.0
    %899 = vmatprep.subr.mxu0 0.0
    %900 = vmatpush1.xpose.msra.mxu0 0.0
    %901 = vmatprep.subr.mxu0 0.0
    %902 = vmatpush1.xpose.msra.mxu0 %v871
    %903 = vmatprep.subr.mxu0 0.0
    %904 = vmatpush1.xpose.msra.mxu0 %v868
    %905 = vmatprep.subr.mxu0 0.0
    %906 = vmatpush2.xpose.msra.mxu0 0.0
    %907 = vmatprep.subr.mxu0 0.0
    %908 = vmatpush2.xpose.msra.mxu0 0.0
    %909 = vmatprep.subr.mxu0 0.0
    %910 = vmatpush2.xpose.msra.mxu0 0.0
    %911 = vmatprep.subr.mxu0 0.0
    %912 = vmatpush2.xpose.msra.mxu0 0.0
    %913 = vmatprep.subr.mxu0 0.0
    %914 = vmatpush2.xpose.msra.mxu0 0.0
    %915 = vmatprep.subr.mxu0 0.0
    %916 = vmatpush2.xpose.msra.mxu0 0.0
    %917 = vmatprep.subr.mxu0 0.0
    %918 = vmatpush2.xpose.msra.mxu0 0.0
    %919 = vmatprep.subr.mxu0 0.0
    %920 = vmatpush2.xpose.msra.mxu0 0.0
    %921 = vmatprep.subr.mxu0 0.0
    %922 = vmatpush2.xpose.msra.mxu0 0.0
    %923 = vmatprep.subr.mxu0 0.0
    %924 = vmatpush2.xpose.msra.mxu0 0.0
    %925 = vmatprep.subr.mxu0 0.0
    %926 = vmatpush2.xpose.msra.mxu0 0.0
    %927 = vmatprep.subr.mxu0 0.0
    %928 = vmatpush2.xpose.msra.mxu0 0.0
    %929 = vmatprep.subr.mxu0 0.0
    %930 = vmatpush2.xpose.msra.mxu0 0.0
    %931 = vmatprep.subr.mxu0 0.0
    %932 = vmatpush2.xpose.msra.mxu0 0.0
    %933 = vmatprep.subr.mxu0 0.0
    %934 = vmatpush2.xpose.msra.mxu0 0.0
    %935 = vmatprep.subr.mxu0 0.0
    %936 = vmatpush2.xpose.msra.mxu0 0.0
    %937 = vmatprep.mubr.f32.mxu0 0.0
    %938 = vmatmul.mubr.f32.gmra.mxu0 %v163
    %v939 = vpop.f32.mrf.mxu0
    %v940 = vadd.f32 0.0, %v939
    %v941 = vpop.f32.mrf.mxu0
    %942 = vdwg.mxu0
    %v943 = vmul.f32 %v940, 0.25
    %v944 = vsel %vm161, %v943, -inf
    %945 = vmax.xlane.f32.xlu0 %v944
    %v946 = vpop.xlane.xlu0 %945
    %v947 = vsub.f32 %v943, %v946
    %v948 = vmul.f32 %v947, 1.442695
    %v949 = vpow.pop %v948
    %v950 = vsel %vm161, %v949, 0.0
    %951 = vadd.xlane.f32.xlu0 %v950
    %v952 = vpop.xlane.xlu0 %951
    %v953 = vrcp.pop %v952
    %v954 = vmul.f32 %v949, %v953
    %955 = vrot.lane.b32.xlu0 %v153, 64
    %v956 = vpop.permute.xlu0 %955
    %957 = vrot.lane.b32.xlu0 %v158, 64
    %v958 = vpop.permute.xlu0 %957
    %v962 = vsel %vm161, %v954, 0
    %964 = vmatprep.subr.mxu0 0.0
    %965 = vmatpush1.msra.mxu0 0.0
    %966 = vmatprep.subr.mxu0 0.0
    %967 = vmatpush1.msra.mxu0 0.0
    %968 = vmatprep.subr.mxu0 0.0
    %969 = vmatpush1.msra.mxu0 0.0
    %970 = vmatprep.subr.mxu0 0.0
    %971 = vmatpush1.msra.mxu0 0.0
    %972 = vmatprep.subr.mxu0 0.0
    %973 = vmatpush1.msra.mxu0 0.0
    %974 = vmatprep.subr.mxu0 0.0
    %975 = vmatpush1.msra.mxu0 0.0
    %976 = vmatprep.subr.mxu0 0.0
    %977 = vmatpush1.msra.mxu0 0.0
    %978 = vmatprep.subr.mxu0 0.0
    %979 = vmatpush1.msra.mxu0 0.0
    %980 = vmatprep.subr.mxu0 0.0
    %981 = vmatpush1.msra.mxu0 0.0
    %982 = vmatprep.subr.mxu0 0.0
    %983 = vmatpush1.msra.mxu0 0.0
    %984 = vmatprep.subr.mxu0 0.0
    %985 = vmatpush1.msra.mxu0 0.0
    %986 = vmatprep.subr.mxu0 0.0
    %987 = vmatpush1.msra.mxu0 0.0
    %988 = vmatprep.subr.mxu0 0.0
    %989 = vmatpush1.msra.mxu0 0.0
    %990 = vmatprep.subr.mxu0 0.0
    %991 = vmatpush1.msra.mxu0 0.0
    %992 = vmatprep.subr.mxu0 0.0
    %993 = vmatpush1.msra.mxu0 %v958
    %994 = vmatprep.subr.mxu0 0.0
    %995 = vmatpush1.msra.mxu0 %v956
    %996 = vmatprep.subr.mxu0 0.0
    %997 = vmatpush2.msra.mxu0 0.0
    %998 = vmatprep.subr.mxu0 0.0
    %999 = vmatpush2.msra.mxu0 0.0
    %1000 = vmatprep.subr.mxu0 0.0
    %1001 = vmatpush2.msra.mxu0 0.0
    %1002 = vmatprep.subr.mxu0 0.0
    %1003 = vmatpush2.msra.mxu0 0.0
    %1004 = vmatprep.subr.mxu0 0.0
    %1005 = vmatpush2.msra.mxu0 0.0
    %1006 = vmatprep.subr.mxu0 0.0
    %1007 = vmatpush2.msra.mxu0 0.0
    %1008 = vmatprep.subr.mxu0 0.0
    %1009 = vmatpush2.msra.mxu0 0.0
    %1010 = vmatprep.subr.mxu0 0.0
    %1011 = vmatpush2.msra.mxu0 0.0
    %1012 = vmatprep.subr.mxu0 0.0
    %1013 = vmatpush2.msra.mxu0 0.0
    %1014 = vmatprep.subr.mxu0 0.0
    %1015 = vmatpush2.msra.mxu0 0.0
    %1016 = vmatprep.subr.mxu0 0.0
    %1017 = vmatpush2.msra.mxu0 0.0
    %1018 = vmatprep.subr.mxu0 0.0
    %1019 = vmatpush2.msra.mxu0 0.0
    %1020 = vmatprep.subr.mxu0 0.0
    %1021 = vmatpush2.msra.mxu0 0.0
    %1022 = vmatprep.subr.mxu0 0.0
    %1023 = vmatpush2.msra.mxu0 0.0
    %1024 = vmatprep.subr.mxu0 0.0
    %1025 = vmatpush2.msra.mxu0 0.0
    %1026 = vmatprep.subr.mxu0 0.0
    %1027 = vmatpush2.msra.mxu0 0.0
    %1028 = vmatprep.mubr.f32.mxu0 0.0
    %1029 = vmatmul.mubr.f32.gmra.mxu0 %v962
    %v1030 = vpop.f32.mrf.mxu0
    %v1031 = vadd.f32 0.0, %v1030
    %v1032 = vpop.f32.mrf.mxu0
    %1033 = vdwg.mxu0
    %1034 = vrot.lane.b32.xlu0 %v153, 112
    %v1035 = vpop.permute.xlu0 %1034
    %1036 = vrot.lane.b32.xlu0 %v158, 112
    %v1037 = vpop.permute.xlu0 %1036
    %v1038 = vsel %vm161, %v1035, 0
    %v1040 = vsel %vm161, %v1037, 0
    %1042 = vmatprep.subr.mxu0 0.0
    %1043 = vmatpush1.xpose.msra.mxu0 0.0
    %1044 = vmatprep.subr.mxu0 0.0
    %1045 = vmatpush1.xpose.msra.mxu0 0.0
    %1046 = vmatprep.subr.mxu0 0.0
    %1047 = vmatpush1.xpose.msra.mxu0 0.0
    %1048 = vmatprep.subr.mxu0 0.0
    %1049 = vmatpush1.xpose.msra.mxu0 0.0
    %1050 = vmatprep.subr.mxu0 0.0
    %1051 = vmatpush1.xpose.msra.mxu0 0.0
    %1052 = vmatprep.subr.mxu0 0.0
    %1053 = vmatpush1.xpose.msra.mxu0 0.0
    %1054 = vmatprep.subr.mxu0 0.0
    %1055 = vmatpush1.xpose.msra.mxu0 0.0
    %1056 = vmatprep.subr.mxu0 0.0
    %1057 = vmatpush1.xpose.msra.mxu0 0.0
    %1058 = vmatprep.subr.mxu0 0.0
    %1059 = vmatpush1.xpose.msra.mxu0 0.0
    %1060 = vmatprep.subr.mxu0 0.0
    %1061 = vmatpush1.xpose.msra.mxu0 0.0
    %1062 = vmatprep.subr.mxu0 0.0
    %1063 = vmatpush1.xpose.msra.mxu0 0.0
    %1064 = vmatprep.subr.mxu0 0.0
    %1065 = vmatpush1.xpose.msra.mxu0 0.0
    %1066 = vmatprep.subr.mxu0 0.0
    %1067 = vmatpush1.xpose.msra.mxu0 0.0
    %1068 = vmatprep.subr.mxu0 0.0
    %1069 = vmatpush1.xpose.msra.mxu0 0.0
    %1070 = vmatprep.subr.mxu0 0.0
    %1071 = vmatpush1.xpose.msra.mxu0 %v1040
    %1072 = vmatprep.subr.mxu0 0.0
    %1073 = vmatpush1.xpose.msra.mxu0 %v1038
    %1074 = vmatprep.subr.mxu0 0.0
    %1075 = vmatpush2.xpose.msra.mxu0 0.0
    %1076 = vmatprep.subr.mxu0 0.0
    %1077 = vmatpush2.xpose.msra.mxu0 0.0
    %1078 = vmatprep.subr.mxu0 0.0
    %1079 = vmatpush2.xpose.msra.mxu0 0.0
    %1080 = vmatprep.subr.mxu0 0.0
    %1081 = vmatpush2.xpose.msra.mxu0 0.0
    %1082 = vmatprep.subr.mxu0 0.0
    %1083 = vmatpush2.xpose.msra.mxu0 0.0
    %1084 = vmatprep.subr.mxu0 0.0
    %1085 = vmatpush2.xpose.msra.mxu0 0.0
    %1086 = vmatprep.subr.mxu0 0.0
    %1087 = vmatpush2.xpose.msra.mxu0 0.0
    %1088 = vmatprep.subr.mxu0 0.0
    %1089 = vmatpush2.xpose.msra.mxu0 0.0
    %1090 = vmatprep.subr.mxu0 0.0
    %1091 = vmatpush2.xpose.msra.mxu0 0.0
    %1092 = vmatprep.subr.mxu0 0.0
    %1093 = vmatpush2.xpose.msra.mxu0 0.0
    %1094 = vmatprep.subr.mxu0 0.0
    %1095 = vmatpush2.xpose.msra.mxu0 0.0
    %1096 = vmatprep.subr.mxu0 0.0
    %1097 = vmatpush2.xpose.msra.mxu0 0.0
    %1098 = vmatprep.subr.mxu0 0.0
    %1099 = vmatpush2.xpose.msra.mxu0 0.0
    %1100 = vmatprep.subr.mxu0 0.0
    %1101 = vmatpush2.xpose.msra.mxu0 0.0
    %1102 = vmatprep.subr.mxu0 0.0
    %1103 = vmatpush2.xpose.msra.mxu0 0.0
    %1104 = vmatprep.subr.mxu0 0.0
    %1105 = vmatpush2.xpose.msra.mxu0 0.0
    %1106 = vmatprep.mubr.f32.mxu0 0.0
    %1107 = vmatmul.mubr.f32.gmra.mxu0 %v338
    %v1108 = vpop.f32.mrf.mxu0
    %v1109 = vadd.f32 0.0, %v1108
    %v1110 = vpop.f32.mrf.mxu0
    %1111 = vdwg.mxu0
    %v1112 = vmul.f32 %v1109, 0.25
    %v1113 = vsel %vm161, %v1112, -inf
    %1114 = vmax.xlane.f32.xlu0 %v1113
    %v1115 = vpop.xlane.xlu0 %1114
    %v1116 = vsub.f32 %v1112, %v1115
    %v1117 = vmul.f32 %v1116, 1.442695
    %v1118 = vpow.pop %v1117
    %v1119 = vsel %vm161, %v1118, 0.0
    %1120 = vadd.xlane.f32.xlu0 %v1119
    %v1121 = vpop.xlane.xlu0 %1120
    %v1122 = vrcp.pop %v1121
    %v1123 = vmul.f32 %v1118, %v1122
    %1124 = vrot.lane.b32.xlu0 %v153, 48
    %v1125 = vpop.permute.xlu0 %1124
    %1126 = vrot.lane.b32.xlu0 %v158, 48
    %v1127 = vpop.permute.xlu0 %1126
    %v1131 = vsel %vm161, %v1123, 0
    %1133 = vmatprep.subr.mxu0 0.0
    %1134 = vmatpush1.msra.mxu0 0.0
    %1135 = vmatprep.subr.mxu0 0.0
    %1136 = vmatpush1.msra.mxu0 0.0
    %1137 = vmatprep.subr.mxu0 0.0
    %1138 = vmatpush1.msra.mxu0 0.0
    %1139 = vmatprep.subr.mxu0 0.0
    %1140 = vmatpush1.msra.mxu0 0.0
    %1141 = vmatprep.subr.mxu0 0.0
    %1142 = vmatpush1.msra.mxu0 0.0
    %1143 = vmatprep.subr.mxu0 0.0
    %1144 = vmatpush1.msra.mxu0 0.0
    %1145 = vmatprep.subr.mxu0 0.0
    %1146 = vmatpush1.msra.mxu0 0.0
    %1147 = vmatprep.subr.mxu0 0.0
    %1148 = vmatpush1.msra.mxu0 0.0
    %1149 = vmatprep.subr.mxu0 0.0
    %1150 = vmatpush1.msra.mxu0 0.0
    %1151 = vmatprep.subr.mxu0 0.0
    %1152 = vmatpush1.msra.mxu0 0.0
    %1153 = vmatprep.subr.mxu0 0.0
    %1154 = vmatpush1.msra.mxu0 0.0
    %1155 = vmatprep.subr.mxu0 0.0
    %1156 = vmatpush1.msra.mxu0 0.0
    %1157 = vmatprep.subr.mxu0 0.0
    %1158 = vmatpush1.msra.mxu0 0.0
    %1159 = vmatprep.subr.mxu0 0.0
    %1160 = vmatpush1.msra.mxu0 0.0
    %1161 = vmatprep.subr.mxu0 0.0
    %1162 = vmatpush1.msra.mxu0 %v1127
    %1163 = vmatprep.subr.mxu0 0.0
    %1164 = vmatpush1.msra.mxu0 %v1125
    %1165 = vmatprep.subr.mxu0 0.0
    %1166 = vmatpush2.msra.mxu0 0.0
    %1167 = vmatprep.subr.mxu0 0.0
    %1168 = vmatpush2.msra.mxu0 0.0
    %1169 = vmatprep.subr.mxu0 0.0
    %1170 = vmatpush2.msra.mxu0 0.0
    %1171 = vmatprep.subr.mxu0 0.0
    %1172 = vmatpush2.msra.mxu0 0.0
    %1173 = vmatprep.subr.mxu0 0.0
    %1174 = vmatpush2.msra.mxu0 0.0
    %1175 = vmatprep.subr.mxu0 0.0
    %1176 = vmatpush2.msra.mxu0 0.0
    %1177 = vmatprep.subr.mxu0 0.0
    %1178 = vmatpush2.msra.mxu0 0.0
    %1179 = vmatprep.subr.mxu0 0.0
    %1180 = vmatpush2.msra.mxu0 0.0
    %1181 = vmatprep.subr.mxu0 0.0
    %1182 = vmatpush2.msra.mxu0 0.0
    %1183 = vmatprep.subr.mxu0 0.0
    %1184 = vmatpush2.msra.mxu0 0.0
    %1185 = vmatprep.subr.mxu0 0.0
    %1186 = vmatpush2.msra.mxu0 0.0
    %1187 = vmatprep.subr.mxu0 0.0
    %1188 = vmatpush2.msra.mxu0 0.0
    %1189 = vmatprep.subr.mxu0 0.0
    %1190 = vmatpush2.msra.mxu0 0.0
    %1191 = vmatprep.subr.mxu0 0.0
    %1192 = vmatpush2.msra.mxu0 0.0
    %1193 = vmatprep.subr.mxu0 0.0
    %1194 = vmatpush2.msra.mxu0 0.0
    %1195 = vmatprep.subr.mxu0 0.0
    %1196 = vmatpush2.msra.mxu0 0.0
    %1197 = vmatprep.mubr.f32.mxu0 0.0
    %1198 = vmatmul.mubr.f32.gmra.mxu0 %v1131
    %v1199 = vpop.f32.mrf.mxu0
    %v1200 = vadd.f32 0.0, %v1199
    %v1201 = vpop.f32.mrf.mxu0
    %1202 = vdwg.mxu0
    %1203 = vrot.lane.b32.xlu0 %v153, 96
    %v1204 = vpop.permute.xlu0 %1203
    %1205 = vrot.lane.b32.xlu0 %v158, 96
    %v1206 = vpop.permute.xlu0 %1205
    %v1207 = vsel %vm161, %v1204, 0
    %v1209 = vsel %vm161, %v1206, 0
    %1211 = vmatprep.subr.mxu0 0.0
    %1212 = vmatpush1.xpose.msra.mxu0 0.0
    %1213 = vmatprep.subr.mxu0 0.0
    %1214 = vmatpush1.xpose.msra.mxu0 0.0
    %1215 = vmatprep.subr.mxu0 0.0
    %1216 = vmatpush1.xpose.msra.mxu0 0.0
    %1217 = vmatprep.subr.mxu0 0.0
    %1218 = vmatpush1.xpose.msra.mxu0 0.0
    %1219 = vmatprep.subr.mxu0 0.0
    %1220 = vmatpush1.xpose.msra.mxu0 0.0
    %1221 = vmatprep.subr.mxu0 0.0
    %1222 = vmatpush1.xpose.msra.mxu0 0.0
    %1223 = vmatprep.subr.mxu0 0.0
    %1224 = vmatpush1.xpose.msra.mxu0 0.0
    %1225 = vmatprep.subr.mxu0 0.0
    %1226 = vmatpush1.xpose.msra.mxu0 0.0
    %1227 = vmatprep.subr.mxu0 0.0
    %1228 = vmatpush1.xpose.msra.mxu0 0.0
    %1229 = vmatprep.subr.mxu0 0.0
    %1230 = vmatpush1.xpose.msra.mxu0 0.0
    %1231 = vmatprep.subr.mxu0 0.0
    %1232 = vmatpush1.xpose.msra.mxu0 0.0
    %1233 = vmatprep.subr.mxu0 0.0
    %1234 = vmatpush1.xpose.msra.mxu0 0.0
    %1235 = vmatprep.subr.mxu0 0.0
    %1236 = vmatpush1.xpose.msra.mxu0 0.0
    %1237 = vmatprep.subr.mxu0 0.0
    %1238 = vmatpush1.xpose.msra.mxu0 0.0
    %1239 = vmatprep.subr.mxu0 0.0
    %1240 = vmatpush1.xpose.msra.mxu0 %v1209
    %1241 = vmatprep.subr.mxu0 0.0
    %1242 = vmatpush1.xpose.msra.mxu0 %v1207
    %1243 = vmatprep.subr.mxu0 0.0
    %1244 = vmatpush2.xpose.msra.mxu0 0.0
    %1245 = vmatprep.subr.mxu0 0.0
    %1246 = vmatpush2.xpose.msra.mxu0 0.0
    %1247 = vmatprep.subr.mxu0 0.0
    %1248 = vmatpush2.xpose.msra.mxu0 0.0
    %1249 = vmatprep.subr.mxu0 0.0
    %1250 = vmatpush2.xpose.msra.mxu0 0.0
    %1251 = vmatprep.subr.mxu0 0.0
    %1252 = vmatpush2.xpose.msra.mxu0 0.0
    %1253 = vmatprep.subr.mxu0 0.0
    %1254 = vmatpush2.xpose.msra.mxu0 0.0
    %1255 = vmatprep.subr.mxu0 0.0
    %1256 = vmatpush2.xpose.msra.mxu0 0.0
    %1257 = vmatprep.subr.mxu0 0.0
    %1258 = vmatpush2.xpose.msra.mxu0 0.0
    %1259 = vmatprep.subr.mxu0 0.0
    %1260 = vmatpush2.xpose.msra.mxu0 0.0
    %1261 = vmatprep.subr.mxu0 0.0
    %1262 = vmatpush2.xpose.msra.mxu0 0.0
    %1263 = vmatprep.subr.mxu0 0.0
    %1264 = vmatpush2.xpose.msra.mxu0 0.0
    %1265 = vmatprep.subr.mxu0 0.0
    %1266 = vmatpush2.xpose.msra.mxu0 0.0
    %1267 = vmatprep.subr.mxu0 0.0
    %1268 = vmatpush2.xpose.msra.mxu0 0.0
    %1269 = vmatprep.subr.mxu0 0.0
    %1270 = vmatpush2.xpose.msra.mxu0 0.0
    %1271 = vmatprep.subr.mxu0 0.0
    %1272 = vmatpush2.xpose.msra.mxu0 0.0
    %1273 = vmatprep.subr.mxu0 0.0
    %1274 = vmatpush2.xpose.msra.mxu0 0.0
    %1275 = vmatprep.mubr.f32.mxu0 0.0
    %1276 = vmatmul.mubr.f32.gmra.mxu0 %v511
    %v1277 = vpop.f32.mrf.mxu0
    %v1278 = vadd.f32 0.0, %v1277
    %v1279 = vpop.f32.mrf.mxu0
    %1280 = vdwg.mxu0
    %v1281 = vmul.f32 %v1278, 0.25
    %v1282 = vsel %vm161, %v1281, -inf
    %1283 = vmax.xlane.f32.xlu0 %v1282
    %v1284 = vpop.xlane.xlu0 %1283
    %v1285 = vsub.f32 %v1281, %v1284
    %v1286 = vmul.f32 %v1285, 1.442695
    %v1287 = vpow.pop %v1286
    %v1288 = vsel %vm161, %v1287, 0.0
    %1289 = vadd.xlane.f32.xlu0 %v1288
    %v1290 = vpop.xlane.xlu0 %1289
    %v1291 = vrcp.pop %v1290
    %v1292 = vmul.f32 %v1287, %v1291
    %1293 = vrot.lane.b32.xlu0 %v153, 32
    %v1294 = vpop.permute.xlu0 %1293
    %1295 = vrot.lane.b32.xlu0 %v158, 32
    %v1296 = vpop.permute.xlu0 %1295
    %v1300 = vsel %vm161, %v1292, 0
    %1302 = vmatprep.subr.mxu0 0.0
    %1303 = vmatpush1.msra.mxu0 0.0
    %1304 = vmatprep.subr.mxu0 0.0
    %1305 = vmatpush1.msra.mxu0 0.0
    %1306 = vmatprep.subr.mxu0 0.0
    %1307 = vmatpush1.msra.mxu0 0.0
    %1308 = vmatprep.subr.mxu0 0.0
    %1309 = vmatpush1.msra.mxu0 0.0
    %1310 = vmatprep.subr.mxu0 0.0
    %1311 = vmatpush1.msra.mxu0 0.0
    %1312 = vmatprep.subr.mxu0 0.0
    %1313 = vmatpush1.msra.mxu0 0.0
    %1314 = vmatprep.subr.mxu0 0.0
    %1315 = vmatpush1.msra.mxu0 0.0
    %1316 = vmatprep.subr.mxu0 0.0
    %1317 = vmatpush1.msra.mxu0 0.0
    %1318 = vmatprep.subr.mxu0 0.0
    %1319 = vmatpush1.msra.mxu0 0.0
    %1320 = vmatprep.subr.mxu0 0.0
    %1321 = vmatpush1.msra.mxu0 0.0
    %1322 = vmatprep.subr.mxu0 0.0
    %1323 = vmatpush1.msra.mxu0 0.0
    %1324 = vmatprep.subr.mxu0 0.0
    %1325 = vmatpush1.msra.mxu0 0.0
    %1326 = vmatprep.subr.mxu0 0.0
    %1327 = vmatpush1.msra.mxu0 0.0
    %1328 = vmatprep.subr.mxu0 0.0
    %1329 = vmatpush1.msra.mxu0 0.0
    %1330 = vmatprep.subr.mxu0 0.0
    %1331 = vmatpush1.msra.mxu0 %v1296
    %1332 = vmatprep.subr.mxu0 0.0
    %1333 = vmatpush1.msra.mxu0 %v1294
    %1334 = vmatprep.subr.mxu0 0.0
    %1335 = vmatpush2.msra.mxu0 0.0
    %1336 = vmatprep.subr.mxu0 0.0
    %1337 = vmatpush2.msra.mxu0 0.0
    %1338 = vmatprep.subr.mxu0 0.0
    %1339 = vmatpush2.msra.mxu0 0.0
    %1340 = vmatprep.subr.mxu0 0.0
    %1341 = vmatpush2.msra.mxu0 0.0
    %1342 = vmatprep.subr.mxu0 0.0
    %1343 = vmatpush2.msra.mxu0 0.0
    %1344 = vmatprep.subr.mxu0 0.0
    %1345 = vmatpush2.msra.mxu0 0.0
    %1346 = vmatprep.subr.mxu0 0.0
    %1347 = vmatpush2.msra.mxu0 0.0
    %1348 = vmatprep.subr.mxu0 0.0
    %1349 = vmatpush2.msra.mxu0 0.0
    %1350 = vmatprep.subr.mxu0 0.0
    %1351 = vmatpush2.msra.mxu0 0.0
    %1352 = vmatprep.subr.mxu0 0.0
    %1353 = vmatpush2.msra.mxu0 0.0
    %1354 = vmatprep.subr.mxu0 0.0
    %1355 = vmatpush2.msra.mxu0 0.0
    %1356 = vmatprep.subr.mxu0 0.0
    %1357 = vmatpush2.msra.mxu0 0.0
    %1358 = vmatprep.subr.mxu0 0.0
    %1359 = vmatpush2.msra.mxu0 0.0
    %1360 = vmatprep.subr.mxu0 0.0
    %1361 = vmatpush2.msra.mxu0 0.0
    %1362 = vmatprep.subr.mxu0 0.0
    %1363 = vmatpush2.msra.mxu0 0.0
    %1364 = vmatprep.subr.mxu0 0.0
    %1365 = vmatpush2.msra.mxu0 0.0
    %1366 = vmatprep.mubr.f32.mxu0 0.0
    %1367 = vmatmul.mubr.f32.gmra.mxu0 %v1300
    %v1368 = vpop.f32.mrf.mxu0
    %v1369 = vadd.f32 0.0, %v1368
    %v1370 = vpop.f32.mrf.mxu0
    %1371 = vdwg.mxu0
    %1372 = vrot.lane.b32.xlu0 %v153, 80
    %v1373 = vpop.permute.xlu0 %1372
    %1374 = vrot.lane.b32.xlu0 %v158, 80
    %v1375 = vpop.permute.xlu0 %1374
    %v1376 = vsel %vm161, %v1373, 0
    %v1378 = vsel %vm161, %v1375, 0
    %1380 = vmatprep.subr.mxu0 0.0
    %1381 = vmatpush1.xpose.msra.mxu0 0.0
    %1382 = vmatprep.subr.mxu0 0.0
    %1383 = vmatpush1.xpose.msra.mxu0 0.0
    %1384 = vmatprep.subr.mxu0 0.0
    %1385 = vmatpush1.xpose.msra.mxu0 0.0
    %1386 = vmatprep.subr.mxu0 0.0
    %1387 = vmatpush1.xpose.msra.mxu0 0.0
    %1388 = vmatprep.subr.mxu0 0.0
    %1389 = vmatpush1.xpose.msra.mxu0 0.0
    %1390 = vmatprep.subr.mxu0 0.0
    %1391 = vmatpush1.xpose.msra.mxu0 0.0
    %1392 = vmatprep.subr.mxu0 0.0
    %1393 = vmatpush1.xpose.msra.mxu0 0.0
    %1394 = vmatprep.subr.mxu0 0.0
    %1395 = vmatpush1.xpose.msra.mxu0 0.0
    %1396 = vmatprep.subr.mxu0 0.0
    %1397 = vmatpush1.xpose.msra.mxu0 0.0
    %1398 = vmatprep.subr.mxu0 0.0
    %1399 = vmatpush1.xpose.msra.mxu0 0.0
    %1400 = vmatprep.subr.mxu0 0.0
    %1401 = vmatpush1.xpose.msra.mxu0 0.0
    %1402 = vmatprep.subr.mxu0 0.0
    %1403 = vmatpush1.xpose.msra.mxu0 0.0
    %1404 = vmatprep.subr.mxu0 0.0
    %1405 = vmatpush1.xpose.msra.mxu0 0.0
    %1406 = vmatprep.subr.mxu0 0.0
    %1407 = vmatpush1.xpose.msra.mxu0 0.0
    %1408 = vmatprep.subr.mxu0 0.0
    %1409 = vmatpush1.xpose.msra.mxu0 %v1378
    %1410 = vmatprep.subr.mxu0 0.0
    %1411 = vmatpush1.xpose.msra.mxu0 %v1376
    %1412 = vmatprep.subr.mxu0 0.0
    %1413 = vmatpush2.xpose.msra.mxu0 0.0
    %1414 = vmatprep.subr.mxu0 0.0
    %1415 = vmatpush2.xpose.msra.mxu0 0.0
    %1416 = vmatprep.subr.mxu0 0.0
    %1417 = vmatpush2.xpose.msra.mxu0 0.0
    %1418 = vmatprep.subr.mxu0 0.0
    %1419 = vmatpush2.xpose.msra.mxu0 0.0
    %1420 = vmatprep.subr.mxu0 0.0
    %1421 = vmatpush2.xpose.msra.mxu0 0.0
    %1422 = vmatprep.subr.mxu0 0.0
    %1423 = vmatpush2.xpose.msra.mxu0 0.0
    %1424 = vmatprep.subr.mxu0 0.0
    %1425 = vmatpush2.xpose.msra.mxu0 0.0
    %1426 = vmatprep.subr.mxu0 0.0
    %1427 = vmatpush2.xpose.msra.mxu0 0.0
    %1428 = vmatprep.subr.mxu0 0.0
    %1429 = vmatpush2.xpose.msra.mxu0 0.0
    %1430 = vmatprep.subr.mxu0 0.0
    %1431 = vmatpush2.xpose.msra.mxu0 0.0
    %1432 = vmatprep.subr.mxu0 0.0
    %1433 = vmatpush2.xpose.msra.mxu0 0.0
    %1434 = vmatprep.subr.mxu0 0.0
    %1435 = vmatpush2.xpose.msra.mxu0 0.0
    %1436 = vmatprep.subr.mxu0 0.0
    %1437 = vmatpush2.xpose.msra.mxu0 0.0
    %1438 = vmatprep.subr.mxu0 0.0
    %1439 = vmatpush2.xpose.msra.mxu0 0.0
    %1440 = vmatprep.subr.mxu0 0.0
    %1441 = vmatpush2.xpose.msra.mxu0 0.0
    %1442 = vmatprep.subr.mxu0 0.0
    %1443 = vmatpush2.xpose.msra.mxu0 0.0
    %1444 = vmatprep.mubr.f32.mxu0 0.0
    %1445 = vmatmul.mubr.f32.gmra.mxu0 %v684
    %v1446 = vpop.f32.mrf.mxu0
    %v1447 = vadd.f32 0.0, %v1446
    %v1448 = vpop.f32.mrf.mxu0
    %1449 = vdwg.mxu0
    %v1450 = vmul.f32 %v1447, 0.25
    %v1451 = vsel %vm161, %v1450, -inf
    %1452 = vmax.xlane.f32.xlu0 %v1451
    %v1453 = vpop.xlane.xlu0 %1452
    %v1454 = vsub.f32 %v1450, %v1453
    %v1455 = vmul.f32 %v1454, 1.442695
    %v1456 = vpow.pop %v1455
    %v1457 = vsel %vm161, %v1456, 0.0
    %1458 = vadd.xlane.f32.xlu0 %v1457
    %v1459 = vpop.xlane.xlu0 %1458
    %v1460 = vrcp.pop %v1459
    %v1461 = vmul.f32 %v1456, %v1460
    %1462 = vrot.lane.b32.xlu0 %v153, 16
    %v1463 = vpop.permute.xlu0 %1462
    %1464 = vrot.lane.b32.xlu0 %v158, 16
    %v1465 = vpop.permute.xlu0 %1464
    %v1469 = vsel %vm161, %v1461, 0
    %1471 = vmatprep.subr.mxu0 0.0
    %1472 = vmatpush1.msra.mxu0 0.0
    %1473 = vmatprep.subr.mxu0 0.0
    %1474 = vmatpush1.msra.mxu0 0.0
    %1475 = vmatprep.subr.mxu0 0.0
    %1476 = vmatpush1.msra.mxu0 0.0
    %1477 = vmatprep.subr.mxu0 0.0
    %1478 = vmatpush1.msra.mxu0 0.0
    %1479 = vmatprep.subr.mxu0 0.0
    %1480 = vmatpush1.msra.mxu0 0.0
    %1481 = vmatprep.subr.mxu0 0.0
    %1482 = vmatpush1.msra.mxu0 0.0
    %1483 = vmatprep.subr.mxu0 0.0
    %1484 = vmatpush1.msra.mxu0 0.0
    %1485 = vmatprep.subr.mxu0 0.0
    %1486 = vmatpush1.msra.mxu0 0.0
    %1487 = vmatprep.subr.mxu0 0.0
    %1488 = vmatpush1.msra.mxu0 0.0
    %1489 = vmatprep.subr.mxu0 0.0
    %1490 = vmatpush1.msra.mxu0 0.0
    %1491 = vmatprep.subr.mxu0 0.0
    %1492 = vmatpush1.msra.mxu0 0.0
    %1493 = vmatprep.subr.mxu0 0.0
    %1494 = vmatpush1.msra.mxu0 0.0
    %1495 = vmatprep.subr.mxu0 0.0
    %1496 = vmatpush1.msra.mxu0 0.0
    %1497 = vmatprep.subr.mxu0 0.0
    %1498 = vmatpush1.msra.mxu0 0.0
    %1499 = vmatprep.subr.mxu0 0.0
    %1500 = vmatpush1.msra.mxu0 %v1465
    %1501 = vmatprep.subr.mxu0 0.0
    %1502 = vmatpush1.msra.mxu0 %v1463
    %1503 = vmatprep.subr.mxu0 0.0
    %1504 = vmatpush2.msra.mxu0 0.0
    %1505 = vmatprep.subr.mxu0 0.0
    %1506 = vmatpush2.msra.mxu0 0.0
    %1507 = vmatprep.subr.mxu0 0.0
    %1508 = vmatpush2.msra.mxu0 0.0
    %1509 = vmatprep.subr.mxu0 0.0
    %1510 = vmatpush2.msra.mxu0 0.0
    %1511 = vmatprep.subr.mxu0 0.0
    %1512 = vmatpush2.msra.mxu0 0.0
    %1513 = vmatprep.subr.mxu0 0.0
    %1514 = vmatpush2.msra.mxu0 0.0
    %1515 = vmatprep.subr.mxu0 0.0
    %1516 = vmatpush2.msra.mxu0 0.0
    %1517 = vmatprep.subr.mxu0 0.0
    %1518 = vmatpush2.msra.mxu0 0.0
    %1519 = vmatprep.subr.mxu0 0.0
    %1520 = vmatpush2.msra.mxu0 0.0
    %1521 = vmatprep.subr.mxu0 0.0
    %1522 = vmatpush2.msra.mxu0 0.0
    %1523 = vmatprep.subr.mxu0 0.0
    %1524 = vmatpush2.msra.mxu0 0.0
    %1525 = vmatprep.subr.mxu0 0.0
    %1526 = vmatpush2.msra.mxu0 0.0
    %1527 = vmatprep.subr.mxu0 0.0
    %1528 = vmatpush2.msra.mxu0 0.0
    %1529 = vmatprep.subr.mxu0 0.0
    %1530 = vmatpush2.msra.mxu0 0.0
    %1531 = vmatprep.subr.mxu0 0.0
    %1532 = vmatpush2.msra.mxu0 0.0
    %1533 = vmatprep.subr.mxu0 0.0
    %1534 = vmatpush2.msra.mxu0 0.0
    %1535 = vmatprep.mubr.f32.mxu0 0.0
    %1536 = vmatmul.mubr.f32.gmra.mxu0 %v1469
    %v1537 = vpop.f32.mrf.mxu0
    %v1538 = vadd.f32 0.0, %v1537
    %v1539 = vpop.f32.mrf.mxu0
    %1540 = vdwg.mxu0
    %1542 = vrot.lane.b32.xlu0 %v1200, 16
    %v1543 = vpop.permute.xlu0 %1542
    %1546 = vrot.lane.b32.xlu0 %v1369, 32
    %v1547 = vpop.permute.xlu0 %1546
    %1550 = vrot.lane.b32.xlu0 %v1538, 48
    %v1551 = vpop.permute.xlu0 %1550
    %v1553 = vsel %vm161, %v1031, %v1543
    %v1554 = vsel %vm63, %v1553, %v1547
    %v1555 = vsel %vm865, %v1554, %v1551
    %v1556 = vlaneseq
    %v1557 = vshrl.u32 %v1556, 7
    %v1558 = vsub.s32 0, %v1557
    %v1559 = vrot.slane %v58, %v1558
    %vm1560 = vcmask 523264
    %v1562 = vsel %vm1560, %v866, 0
    %v1565 = vsel %vm1560, %v1555, 0
    %1567 = vmatprep.subr.mxu0 0.0
    %1568 = vmatpush1.msra.mxu0 0.0
    %1569 = vmatprep.subr.mxu0 0.0
    %1570 = vmatpush1.msra.mxu0 0.0
    %1571 = vmatprep.subr.mxu0 0.0
    %1572 = vmatpush1.msra.mxu0 0.0
    %1573 = vmatprep.subr.mxu0 0.0
    %1574 = vmatpush1.msra.mxu0 0.0
    %1575 = vmatprep.subr.mxu0 0.0
    %1576 = vmatpush1.msra.mxu0 0.0
    %1577 = vmatprep.subr.mxu0 0.0
    %1578 = vmatpush1.msra.mxu0 0.0
    %1579 = vmatprep.subr.mxu0 0.0
    %1580 = vmatpush1.msra.mxu0 0.0
    %1581 = vmatprep.subr.mxu0 0.0
    %1582 = vmatpush1.msra.mxu0 0.0
    %1583 = vmatprep.subr.mxu0 0.0
    %1584 = vmatpush1.msra.mxu0 %v56
    %1585 = vmatprep.subr.mxu0 0.0
    %1586 = vmatpush1.msra.mxu0 %v55
    %1587 = vmatprep.subr.mxu0 0.0
    %1588 = vmatpush1.msra.mxu0 %v54
    %1589 = vmatprep.subr.mxu0 0.0
    %1590 = vmatpush1.msra.mxu0 %v53
    %1591 = vmatprep.subr.mxu0 0.0
    %1592 = vmatpush1.msra.mxu0 %v52
    %1593 = vmatprep.subr.mxu0 0.0
    %1594 = vmatpush1.msra.mxu0 %v51
    %1595 = vmatprep.subr.mxu0 0.0
    %1596 = vmatpush1.msra.mxu0 %v50
    %1597 = vmatprep.subr.mxu0 0.0
    %1598 = vmatpush1.msra.mxu0 %v49
    %1599 = vmatprep.subr.mxu0 0.0
    %1600 = vmatpush2.msra.mxu0 0.0
    %1601 = vmatprep.subr.mxu0 0.0
    %1602 = vmatpush2.msra.mxu0 0.0
    %1603 = vmatprep.subr.mxu0 0.0
    %1604 = vmatpush2.msra.mxu0 0.0
    %1605 = vmatprep.subr.mxu0 0.0
    %1606 = vmatpush2.msra.mxu0 0.0
    %1607 = vmatprep.subr.mxu0 0.0
    %1608 = vmatpush2.msra.mxu0 0.0
    %1609 = vmatprep.subr.mxu0 0.0
    %1610 = vmatpush2.msra.mxu0 0.0
    %1611 = vmatprep.subr.mxu0 0.0
    %1612 = vmatpush2.msra.mxu0 0.0
    %1613 = vmatprep.subr.mxu0 0.0
    %1614 = vmatpush2.msra.mxu0 0.0
    %1615 = vmatprep.subr.mxu0 0.0
    %1616 = vmatpush2.msra.mxu0 0.0
    %1617 = vmatprep.subr.mxu0 0.0
    %1618 = vmatpush2.msra.mxu0 0.0
    %1619 = vmatprep.subr.mxu0 0.0
    %1620 = vmatpush2.msra.mxu0 0.0
    %1621 = vmatprep.subr.mxu0 0.0
    %1622 = vmatpush2.msra.mxu0 0.0
    %1623 = vmatprep.subr.mxu0 0.0
    %1624 = vmatpush2.msra.mxu0 0.0
    %1625 = vmatprep.subr.mxu0 0.0
    %1626 = vmatpush2.msra.mxu0 0.0
    %1627 = vmatprep.subr.mxu0 0.0
    %1628 = vmatpush2.msra.mxu0 0.0
    %1629 = vmatprep.subr.mxu0 0.0
    %1630 = vmatpush2.msra.mxu0 0.0
    %1631 = vmatprep.mubr.f32.mxu0 0.0
    %1632 = vmatmul.mubr.f32.gmra.mxu0 %v1562
    %v1633 = vpop.f32.mrf.mxu0
    %v1634 = vadd.f32 %v1559, %v1633
    %v1635 = vpop.f32.mrf.mxu0
    %1636 = vmatprep.mubr.f32.mxu0 0.0
    %1637 = vmatmul.mubr.f32.gmra.mxu0 %v1565
    %v1638 = vpop.f32.mrf.mxu0
    %v1639 = vadd.f32 %v1559, %v1638
    %v1640 = vpop.f32.mrf.mxu0
    %1641 = vdwg.mxu0
    %1642 = vst [vmem:[#allocation7] sm:$0xff] %v1634
    %s1643 = scalar_lea.vmem [#allocation7], 8
    %1644 = vst [vmem:[%s1643] sm:$0xff] %v1639
    // Predicated region
    $region18: #{tpu_custom_call.1} parent=1 // pred_check
      _
    $region19: #{tpu_custom_call.1} parent=1 // pred_check_branch
      %1646 = sbr.rel (0) target = $region21
    $region20: #{tpu_custom_call.1} parent=1 // pred_region
      %s1648 = ssub.s32 256, 256
      %1649 = vsyncadd [#allocation4], %s1648
      %s1650 = sshll.u32 [#allocation7], 4
      %s1651 = int_to_ptr.vmem [resolvable:$true] %s1650
      %1656 = dma.vmem_to_hbm [thread:$0]  %s1651, 256, %s2, [#allocation4], 128, 128, 8
    $region21: #{tpu_custom_call.1} parent=1 // pred_fallthru
      _
    // Predicated region
    $region22: #{tpu_custom_call.1} parent=1 // pred_check
      _
    $region23: #{tpu_custom_call.1} parent=1 // pred_check_branch
      %1658 = sbr.rel (0) target = $region25
    $region24: #{tpu_custom_call.1} parent=1 // pred_region
      %1659 = dma.done [#allocation4], 256
    $region25: #{tpu_custom_call.1} parent=1 // pred_fallthru
      _
    %1660 = vsyncpa [#allocation3], 1
    %1661 = vsyncpa [#allocation6], 1
    %1662 = vsyncpa [#allocation4], 1

</llo_original>
